<compile_context>
chip_gen: v7x
topology: tpu7x:2x2x1
jax: 0.10.0
libtpu: 0.0.40
codegen_flags: <defaults>
</compile_context>

<pallas_src>
import math
import functools

import jax
import jax.numpy as jnp
from jax import lax
from jax.experimental import pallas as pl
from jax.experimental.pallas import tpu as pltpu


def _round_up(x, m):
    return ((x + m - 1) // m) * m


# ------------- Kernel 1: inverse column norms of W (bf16 in, f32 out) ------ #

def _inv_col_norm_kernel(w_ref, o_ref):
    w = w_ref[...].astype(jnp.float32)
    ss = jnp.sum(w * w, axis=0, keepdims=True)
    # rsqrt(max(ss, 1e-24)) == 1 / max(||col||, 1e-12): F.normalize(dim=0) eps.
    o_ref[...] = lax.rsqrt(jnp.maximum(ss, 1e-24))


def inv_col_norm(w, *, tn, vmem_limit_bytes):
    Dp, Cp = w.shape
    return pl.pallas_call(
        _inv_col_norm_kernel,
        out_shape=jax.ShapeDtypeStruct((1, Cp), jnp.float32),
        grid_spec=pltpu.PrefetchScalarGridSpec(
            num_scalar_prefetch=0,
            grid=(Cp // tn,),
            in_specs=[pl.BlockSpec((Dp, tn), lambda j: (0, j))],
            out_specs=pl.BlockSpec((1, tn), lambda j: (0, j))),
        compiler_params=pltpu.CompilerParams(
            dimension_semantics=("parallel",),
            vmem_limit_bytes=vmem_limit_bytes),
    )(w)


# -------- Kernel 2: fused cos_theta matmul + NPC hard-negative epilogue ---- #

def _npcface_fused_kernel(x_ref, w_ref, inv_ref, thr_ref,
                          logit_ref, shc_ref, cnt_ref, *, t, a, scale):
    j = pl.program_id(1)

    @pl.when(j == 0)
    def _():
        shc_ref[...] = jnp.zeros_like(shc_ref)
        cnt_ref[...] = jnp.zeros_like(cnt_ref)

    # cos_theta tile = clamp((x @ W) * inv_norm, -1, 1); bf16 MXU, f32 acc.
    acc = jnp.dot(x_ref[...], w_ref[...], preferred_element_type=jnp.float32)
    cos = jnp.clip(acc * inv_ref[...], -1.0, 1.0)        # (tm, tn) f32
    thr = thr_ref[...]                                   # (tm, 1): cos(theta_gt+m)
    hard = cos > thr                                     # includes gt & padded
                                                         # cols; corrected exactly
                                                         # in the XLA post-pass.
    shc_ref[...] += jnp.sum(jnp.where(hard, cos, 0.0), axis=1, keepdims=True)
    cnt_ref[...] += jnp.sum(jnp.where(hard, 1.0, 0.0), axis=1, keepdims=True)

    # Hard-negative boost with scale folded in; gt column overwritten outside.
    logit_ref[...] = jnp.where(hard, cos * (t * scale) + (a * scale),
                               cos * scale).astype(logit_ref.dtype)


def npcface_fused(x, w, inv_norm, thr, *, tm, tn, t, a, scale, out_dtype,
                  vmem_limit_bytes):
    Bp, Dp = x.shape
    _, Cp = w.shape
    kernel = functools.partial(_npcface_fused_kernel,
                               t=float(t), a=float(a), scale=float(scale))
    return pl.pallas_call(
        kernel,
        out_shape=(jax.ShapeDtypeStruct((Bp, Cp), out_dtype),
                   jax.ShapeDtypeStruct((Bp, 1), jnp.float32),
                   jax.ShapeDtypeStruct((Bp, 1), jnp.float32)),
        grid_spec=pltpu.PrefetchScalarGridSpec(
            num_scalar_prefetch=0,
            grid=(Bp // tm, Cp // tn),
            in_specs=[pl.BlockSpec((tm, Dp), lambda i, j: (i, 0)),   # x resident over j
                      pl.BlockSpec((Dp, tn), lambda i, j: (0, j)),   # W streamed once per i
                      pl.BlockSpec((1, tn), lambda i, j: (0, j)),    # inv col norms
                      pl.BlockSpec((tm, 1), lambda i, j: (i, 0))],   # per-row threshold
            out_specs=(pl.BlockSpec((tm, tn), lambda i, j: (i, j)),
                       pl.BlockSpec((tm, 1), lambda i, j: (i, 0)),   # sum hard cos (acc over j)
                       pl.BlockSpec((tm, 1), lambda i, j: (i, 0)))), # hard count   (acc over j)
        compiler_params=pltpu.CompilerParams(
            dimension_semantics=("parallel", "arbitrary"),
            vmem_limit_bytes=vmem_limit_bytes),
    )(x, w, inv_norm, thr)


# ------------------------------ Full forward ------------------------------- #

_VMEM_BUDGET = 30 * 1024 * 1024   # per-step tile budget (v7x 64 MiB safe w/ margin)


def _fused_vmem_estimate(tm, tn, d_pad, in_itemsize, out_itemsize):
    x_blk = tm * d_pad * in_itemsize
    w_blk = d_pad * tn * in_itemsize
    o_blk = tm * tn * out_itemsize
    small = tn * 4 + 3 * tm * 4
    temps = 6 * tm * tn * 4              # f32 epilogue temporaries (estimate)
    return 2 * (x_blk + w_blk + o_blk + small) + temps


def npcface_forward(x, label, weight, *, margin=0.5, scale=64.0,
                    m0=0.4, m1=0.2, t=1.1, a=0.2,
                    out_dtype=jnp.float32, mm_dtype=jnp.bfloat16):
    """Equivalent of NPCFace.forward(x, label); weight is the (D, C) kernel."""
    B, D = x.shape
    Dw, C = weight.shape
    assert Dw == D, "weight must be (feat_dim, num_class)"
    cos_m, sin_m = math.cos(margin), math.sin(margin)
    mm_itemsize = jnp.dtype(mm_dtype).itemsize
    out_itemsize = jnp.dtype(out_dtype).itemsize

    # ---- tile selection (tk == D_pad: single K step; big M/N tiles) ----
    tm = min(256, _round_up(B, 8))
    tn = min(1024, _round_up(C, 128))
    d_pad = _round_up(D, 128)
    est = functools.partial(_fused_vmem_estimate, d_pad=d_pad,
                            in_itemsize=mm_itemsize, out_itemsize=out_itemsize)
    while tn > 256 and est(tm, tn) > _VMEM_BUDGET:
        tn = max(128, _round_up(tn // 2, 128))
    while tm > 8 and est(tm, tn) > _VMEM_BUDGET:
        tm = max(8, _round_up(tm // 2, 8))
    b_pad = _round_up(B, tm)
    c_pad = _round_up(C, tn)
    vmem_limit = int(min(est(tm, tn) + (16 << 20), 48 << 20))

    x32 = x.astype(jnp.float32)
    w32 = weight.astype(jnp.float32)
    lab = label.astype(jnp.int32)

    # ---- single padded bf16 copies (cast then pad: no padded f32 copy) ----
    x_mm = x.astype(mm_dtype)
    if (b_pad, d_pad) != (B, D):
        x_mm = jnp.pad(x_mm, ((0, b_pad - B), (0, d_pad - D)))
    w_mm = weight.astype(mm_dtype)
    if (d_pad, c_pad) != (D, C):
        w_mm = jnp.pad(w_mm, ((0, d_pad - D), (0, c_pad - C)))

    # ---- per-column inverse norms (reads the bf16 W exactly once) ----
    inv_norm = inv_col_norm(w_mm, tn=tn, vmem_limit_bytes=vmem_limit)  # (1, c_pad)

    # ---- per-row gt / threshold precomputed in f32 (B*D gather; tiny) ----
    w_cols = jnp.take(w32, lab, axis=1)                  # (D, B)
    gt_raw = jnp.sum(x32 * w_cols.T, axis=1)             # (B,)
    gt = jnp.clip(gt_raw * jnp.take(inv_norm[0], lab), -1.0, 1.0)
    sin_theta = jnp.sqrt(jnp.maximum(1.0 - gt * gt, 0.0))
    thr = gt * cos_m - sin_theta * sin_m                  # cos(theta_gt + margin)
    thr_p = thr if b_pad == B else jnp.pad(thr, (0, b_pad - B))
    thr_p = thr_p.reshape(b_pad, 1)

    # ---- fused cos_theta matmul + hard-negative boost + stats ----
    logits, shc, cnt = npcface_fused(
        x_mm, w_mm, inv_norm, thr_p, tm=tm, tn=tn,
        t=t, a=a, scale=scale, out_dtype=out_dtype,
        vmem_limit_bytes=vmem_limit)

    # ---- exact stat corrections: remove gt column + padded class columns ----
    gt_hard = (gt > thr).astype(jnp.float32)
    sum_hard_cos = shc[:B, 0] - gt_hard * gt
    n_hard = cnt[:B, 0] - gt_hard
    if c_pad != C:
        # padded W columns give cos == 0.0 exactly -> counted hard iff thr < 0.
        n_hard = n_hard - (c_pad - C) * (thr < 0.0).astype(jnp.float32)
    n_hard = jnp.clip(n_hard, 1.0, float(C))
    avg_hard_cos = sum_hard_cos / n_hard
    newm = m0 + m1 * avg_hard_cos
    final_gt = jnp.where(gt > 0.0,
                         gt * jnp.cos(newm) - sin_theta * jnp.sin(newm), gt)

    # ---- B-element scatter of final_gt*scale into the gt column ----
    logits = logits.at[jnp.arange(B), lab].set((final_gt * scale).astype(out_dtype))
    if (b_pad, c_pad) != (B, C):
        logits = logits[:B, :C]
    return logits


if __name__ == "__main__":
    # Small shapes consistent with the module (feat_dim -> D, num_class -> C).
    # Deliberately NOT tile-aligned to exercise the padding / correction path.
    B, D, C = 48, 200, 1000
    key = jax.random.PRNGKey(0)
    kx, kw, kl = jax.random.split(key, 3)

    # Features (L2-normalized, the usual input to such heads).
    x = jax.random.normal(kx, (B, D), jnp.float32)
    x = x / jnp.linalg.norm(x, axis=1, keepdims=True)

    # Deterministic init mirroring kernel.uniform_(-1,1).renorm_(2,1,1e-5).mul_(1e5)
    # (columns rescaled to unit L2 norm).
    w = jax.random.uniform(kw, (D, C), jnp.float32, -1.0, 1.0)
    w = w / jnp.maximum(jnp.linalg.norm(w, axis=0, keepdims=True), 1e-5)

    label = jax.random.randint(kl, (B,), 0, C, jnp.int32)

    out = jax.jit(npcface_forward)(x, label, w)
    jax.block_until_ready(out)
    assert out.shape == (B, C)
    assert bool(jnp.isfinite(out).all())
    print("KERNEL_OK")
</pallas_src>

<mosaic_0001>
module attributes {stable_mosaic.version = 11 : i64} {
  func.func @_inv_col_norm_kernel(%arg0: i32, %arg1: memref<256x1024xbf16, #tpu.memory_space<vmem>>, %arg2: memref<1x1024xf32, #tpu.memory_space<vmem>>) attributes {dimension_semantics = [#tpu.dimension_semantics<parallel>], iteration_bounds = array<i64: 1>, scalar_prefetch = 0 : i64, scratch_operands = 0 : i64, tpu.core_type = #tpu.core_type<tc>, window_params = [{transform_indices = @transform_0, window_bounds = array<i64: 256, 1024>}, {transform_indices = @transform_1, window_bounds = array<i64: 1, 1024>}]} {
    %c0 = arith.constant 0 : index
    %c0_0 = arith.constant 0 : index
    %0 = vector.load %arg1[%c0, %c0_0] : memref<256x1024xbf16, #tpu.memory_space<vmem>>, vector<256x1024xbf16>
    %1 = arith.extf %0 : vector<256x1024xbf16> to vector<256x1024xf32>
    %2 = arith.mulf %1, %1 : vector<256x1024xf32>
    %cst = arith.constant dense<0.000000e+00> : vector<1024xf32>
    %3 = vector.multi_reduction <add>, %2, %cst [0] : vector<256x1024xf32> to vector<1024xf32>
    %4 = vector.shape_cast %3 : vector<1024xf32> to vector<1x1024xf32>
    %cst_1 = arith.constant 1.000000e-24 : f32
    %5 = vector.broadcast %cst_1 : f32 to vector<1x1024xf32>
    %6 = arith.maximumf %4, %5 : vector<1x1024xf32>
    %7 = math.rsqrt %6 : vector<1x1024xf32>
    %c0_2 = arith.constant 0 : index
    %c0_3 = arith.constant 0 : index
    %8 = vector.load %arg2[%c0_2, %c0_3] : memref<1x1024xf32, #tpu.memory_space<vmem>>, vector<1x1024xf32>
    tpu.vector_store %arg2[%c0_2, %c0_3], %7 {strides = array<i32>} : memref<1x1024xf32, #tpu.memory_space<vmem>>, vector<1x1024xf32>,
    return
  }
  func.func @transform_0(%arg0: i32) -> (i32, i32) {
    %c0_i32 = arith.constant 0 : i32
    %c0_i32_0 = arith.constant 0 : i32
    return %c0_i32, %arg0 : i32, i32
  }
  func.func @transform_1(%arg0: i32) -> (i32, i32) {
    %c0_i32 = arith.constant 0 : i32
    %c0_i32_0 = arith.constant 0 : i32
    return %c0_i32, %arg0 : i32, i32
  }
}

module attributes {stable_mosaic.version = 11 : i64} {
  func.func @_npcface_fused_kernel(%arg0: i32, %arg1: i32, %arg2: memref<48x256xbf16, #tpu.memory_space<vmem>>, %arg3: memref<256x1024xbf16, #tpu.memory_space<vmem>>, %arg4: memref<1x1024xf32, #tpu.memory_space<vmem>>, %arg5: memref<48x1xf32, #tpu.memory_space<vmem>>, %arg6: memref<48x1024xf32, #tpu.memory_space<vmem>>, %arg7: memref<48x1xf32, #tpu.memory_space<vmem>>, %arg8: memref<48x1xf32, #tpu.memory_space<vmem>>) attributes {dimension_semantics = [#tpu.dimension_semantics<parallel>, #tpu.dimension_semantics<arbitrary>], iteration_bounds = array<i64: 1, 1>, scalar_prefetch = 0 : i64, scratch_operands = 0 : i64, tpu.core_type = #tpu.core_type<tc>, window_params = [{transform_indices = @transform_0, window_bounds = array<i64: 48, 256>}, {transform_indices = @transform_1, window_bounds = array<i64: 256, 1024>}, {transform_indices = @transform_2, window_bounds = array<i64: 1, 1024>}, {transform_indices = @transform_3, window_bounds = array<i64: 48, 1>}, {transform_indices = @transform_4, window_bounds = array<i64: 48, 1024>}, {transform_indices = @transform_5, window_bounds = array<i64: 48, 1>}, {transform_indices = @transform_6, window_bounds = array<i64: 48, 1>}]} {
    %c0_i32 = arith.constant 0 : i32
    %0 = arith.cmpi eq, %arg1, %c0_i32 : i32
    %1 = arith.extui %0 : i1 to i32
    %c0_i32_0 = arith.constant 0 : i32
    %2 = arith.cmpi ne, %1, %c0_i32_0 : i32
    scf.if %2 {
      %cst_28 = arith.constant 0.000000e+00 : f32
      %39 = vector.broadcast %cst_28 : f32 to vector<48x1xf32>
      %c0_29 = arith.constant 0 : index
      %c0_30 = arith.constant 0 : index
      %40 = vector.load %arg7[%c0_29, %c0_30] : memref<48x1xf32, #tpu.memory_space<vmem>>, vector<48x1xf32>
      tpu.vector_store %arg7[%c0_29, %c0_30], %39 {strides = array<i32>} : memref<48x1xf32, #tpu.memory_space<vmem>>, vector<48x1xf32>,
      %cst_31 = arith.constant 0.000000e+00 : f32
      %41 = vector.broadcast %cst_31 : f32 to vector<48x1xf32>
      %c0_32 = arith.constant 0 : index
      %c0_33 = arith.constant 0 : index
      %42 = vector.load %arg8[%c0_32, %c0_33] : memref<48x1xf32, #tpu.memory_space<vmem>>, vector<48x1xf32>
      tpu.vector_store %arg8[%c0_32, %c0_33], %41 {strides = array<i32>} : memref<48x1xf32, #tpu.memory_space<vmem>>, vector<48x1xf32>,
    } else {
    }
    %c0 = arith.constant 0 : index
    %c0_1 = arith.constant 0 : index
    %3 = vector.load %arg2[%c0, %c0_1] : memref<48x256xbf16, #tpu.memory_space<vmem>>, vector<48x256xbf16>
    %c0_2 = arith.constant 0 : index
    %c0_3 = arith.constant 0 : index
    %4 = vector.load %arg3[%c0_2, %c0_3] : memref<256x1024xbf16, #tpu.memory_space<vmem>>, vector<256x1024xbf16>
    %cst = arith.constant dense<0.000000e+00> : vector<48x1024xf32>
    %5 = tpu.matmul %3, %4, %cst {dimension_numbers = #tpu.dot_dimension_numbers<[1], [0], [0], [1], [0, 0, 1, 1], [], []>} : vector<48x256xbf16>, vector<256x1024xbf16>, vector<48x1024xf32> -> vector<48x1024xf32>
    %c0_4 = arith.constant 0 : index
    %c0_5 = arith.constant 0 : index
    %6 = vector.load %arg4[%c0_4, %c0_5] : memref<1x1024xf32, #tpu.memory_space<vmem>>, vector<1x1024xf32>
    %7 = vector.broadcast %6 : vector<1x1024xf32> to vector<48x1024xf32>
    %8 = arith.mulf %5, %7 : vector<48x1024xf32>
    %cst_6 = arith.constant -1.000000e+00 : f32
    %cst_7 = arith.constant 1.000000e+00 : f32
    %9 = vector.broadcast %cst_6 : f32 to vector<48x1024xf32>
    %10 = arith.maximumf %9, %8 : vector<48x1024xf32>
    %11 = vector.broadcast %cst_7 : f32 to vector<48x1024xf32>
    %12 = arith.minimumf %11, %10 : vector<48x1024xf32>
    %c0_8 = arith.constant 0 : index
    %c0_9 = arith.constant 0 : index
    %13 = vector.load %arg5[%c0_8, %c0_9] : memref<48x1xf32, #tpu.memory_space<vmem>>, vector<48x1xf32>
    %14 = vector.broadcast %13 : vector<48x1xf32> to vector<48x1024xf32>
    %15 = arith.cmpf ogt, %12, %14 : vector<48x1024xf32>
    %c0_10 = arith.constant 0 : index
    %c0_11 = arith.constant 0 : index
    %16 = vector.load %arg7[%c0_10, %c0_11] : memref<48x1xf32, #tpu.memory_space<vmem>>, vector<48x1xf32>
    %cst_12 = arith.constant 0.000000e+00 : f32
    %17 = vector.broadcast %cst_12 : f32 to vector<48x1024xf32>
    %18 = arith.select %15, %12, %17 : vector<48x1024xi1>, vector<48x1024xf32>
    %cst_13 = arith.constant dense<0.000000e+00> : vector<48xf32>
    %19 = vector.multi_reduction <add>, %18, %cst_13 [1] : vector<48x1024xf32> to vector<48xf32>
    %20 = vector.shape_cast %19 : vector<48xf32> to vector<48x1xf32>
    %21 = arith.addf %16, %20 : vector<48x1xf32>
    %c0_14 = arith.constant 0 : index
    %c0_15 = arith.constant 0 : index
    %22 = vector.load %arg7[%c0_14, %c0_15] : memref<48x1xf32, #tpu.memory_space<vmem>>, vector<48x1xf32>
    tpu.vector_store %arg7[%c0_14, %c0_15], %21 {strides = array<i32>} : memref<48x1xf32, #tpu.memory_space<vmem>>, vector<48x1xf32>,
    %c0_16 = arith.constant 0 : index
    %c0_17 = arith.constant 0 : index
    %23 = vector.load %arg8[%c0_16, %c0_17] : memref<48x1xf32, #tpu.memory_space<vmem>>, vector<48x1xf32>
    %cst_18 = arith.constant 1.000000e+00 : f32
    %cst_19 = arith.constant 0.000000e+00 : f32
    %24 = vector.broadcast %cst_18 : f32 to vector<48x1024xf32>
    %25 = vector.broadcast %cst_19 : f32 to vector<48x1024xf32>
    %26 = arith.select %15, %24, %25 : vector<48x1024xi1>, vector<48x1024xf32>
    %cst_20 = arith.constant dense<0.000000e+00> : vector<48xf32>
    %27 = vector.multi_reduction <add>, %26, %cst_20 [1] : vector<48x1024xf32> to vector<48xf32>
    %28 = vector.shape_cast %27 : vector<48xf32> to vector<48x1xf32>
    %29 = arith.addf %23, %28 : vector<48x1xf32>
    %c0_21 = arith.constant 0 : index
    %c0_22 = arith.constant 0 : index
    %30 = vector.load %arg8[%c0_21, %c0_22] : memref<48x1xf32, #tpu.memory_space<vmem>>, vector<48x1xf32>
    tpu.vector_store %arg8[%c0_21, %c0_22], %29 {strides = array<i32>} : memref<48x1xf32, #tpu.memory_space<vmem>>, vector<48x1xf32>,
    %cst_23 = arith.constant 7.040000e+01 : f32
    %31 = vector.broadcast %cst_23 : f32 to vector<48x1024xf32>
    %32 = arith.mulf %12, %31 : vector<48x1024xf32>
    %cst_24 = arith.constant 1.280000e+01 : f32
    %33 = vector.broadcast %cst_24 : f32 to vector<48x1024xf32>
    %34 = arith.addf %32, %33 : vector<48x1024xf32>
    %cst_25 = arith.constant 6.400000e+01 : f32
    %35 = vector.broadcast %cst_25 : f32 to vector<48x1024xf32>
    %36 = arith.mulf %12, %35 : vector<48x1024xf32>
    %37 = arith.select %15, %34, %36 : vector<48x1024xi1>, vector<48x1024xf32>
    %c0_26 = arith.constant 0 : index
    %c0_27 = arith.constant 0 : index
    %38 = vector.load %arg6[%c0_26, %c0_27] : memref<48x1024xf32, #tpu.memory_space<vmem>>, vector<48x1024xf32>
    tpu.vector_store %arg6[%c0_26, %c0_27], %37 {strides = array<i32>} : memref<48x1024xf32, #tpu.memory_space<vmem>>, vector<48x1024xf32>,
    return
  }
  func.func @transform_0(%arg0: i32, %arg1: i32) -> (i32, i32) {
    %c0_i32 = arith.constant 0 : i32
    %c0_i32_0 = arith.constant 0 : i32
    return %arg0, %c0_i32 : i32, i32
  }
  func.func @transform_1(%arg0: i32, %arg1: i32) -> (i32, i32) {
    %c0_i32 = arith.constant 0 : i32
    %c0_i32_0 = arith.constant 0 : i32
    return %c0_i32, %arg1 : i32, i32
  }
  func.func @transform_2(%arg0: i32, %arg1: i32) -> (i32, i32) {
    %c0_i32 = arith.constant 0 : i32
    %c0_i32_0 = arith.constant 0 : i32
    return %c0_i32, %arg1 : i32, i32
  }
  func.func @transform_3(%arg0: i32, %arg1: i32) -> (i32, i32) {
    %c0_i32 = arith.constant 0 : i32
    %c0_i32_0 = arith.constant 0 : i32
    return %arg0, %c0_i32 : i32, i32
  }
  func.func @transform_4(%arg0: i32, %arg1: i32) -> (i32, i32) {
    %c0_i32 = arith.constant 0 : i32
    return %arg0, %arg1 : i32, i32
  }
  func.func @transform_5(%arg0: i32, %arg1: i32) -> (i32, i32) {
    %c0_i32 = arith.constant 0 : i32
    %c0_i32_0 = arith.constant 0 : i32
    return %arg0, %c0_i32 : i32, i32
  }
  func.func @transform_6(%arg0: i32, %arg1: i32) -> (i32, i32) {
    %c0_i32 = arith.constant 0 : i32
    %c0_i32_0 = arith.constant 0 : i32
    return %arg0, %c0_i32 : i32, i32
  }
}

</mosaic_0001>

<llo_original>
// kernel: npcface_forward.2
$region0: #{npcface_forward.2}
  #allocation0 [shape = 'u32[]', space=smem, size = 0x4, offset = 0x4, fixed_abs, tag = 'smem constant byte address 0x4 - core index']
  #allocation1 [shape = 'u32[144,128]{1,0:T(1,128)}', space=vmem, size = 0x12000, scoped, tag = 'internal scratch']
  %s0 = inlined_call_operand.vmem [shape: bf16[256,1024], index: 0, kind: input, shape index: {}]
  %s1 = inlined_call_operand.vmem [shape: f32[1,1024], index: 1, kind: output, shape index: {}]
  %s2 = sld [smem:[#allocation0]]
  $region14: #{npcface_forward.2} parent=0
    _
  %s4 = ssub.s32 1, %s2
  %s5 = scalar_select 0, %s4, %s2
  // Predicated region
  $region2: #{npcface_forward.2} parent=0 // pred_check
    _
  $region3: #{npcface_forward.2} parent=0 // pred_check_branch
    %7 = sbr.rel (0) target = $region5
  $region4: #{npcface_forward.2} parent=0 // pred_region
    _
  $region5: #{npcface_forward.2} parent=0 // pred_fallthru
    _
  %v8 = vld [vmem:[%s0] sm:$0xff]
  %v9 = vld [vmem:[%s0 + $0x8] sm:$0xff]
  %v10 = vld [vmem:[%s0 + $0x10] sm:$0xff]
  %v11 = vld [vmem:[%s0 + $0x18] sm:$0xff]
  %v12 = vld [vmem:[%s0 + $0x20] sm:$0xff]
  %v13 = vld [vmem:[%s0 + $0x28] sm:$0xff]
  %v14 = vld [vmem:[%s0 + $0x30] sm:$0xff]
  %v15 = vld [vmem:[%s0 + $0x38] sm:$0xff]
  %v16 = vld [vmem:[%s0 + $0x40] sm:$0xff]
  %v17 = vld [vmem:[%s0 + $0x48] sm:$0xff]
  %v18 = vld [vmem:[%s0 + $0x50] sm:$0xff]
  %v19 = vld [vmem:[%s0 + $0x58] sm:$0xff]
  %v20 = vld [vmem:[%s0 + $0x60] sm:$0xff]
  %v21 = vld [vmem:[%s0 + $0x68] sm:$0xff]
  %v22 = vld [vmem:[%s0 + $0x70] sm:$0xff]
  %v23 = vld [vmem:[%s0 + $0x78] sm:$0xff]
  %v24 = vld [vmem:[%s0 + $0x80] sm:$0xff]
  %v25 = vld [vmem:[%s0 + $0x88] sm:$0xff]
  %v26 = vld [vmem:[%s0 + $0x90] sm:$0xff]
  %v27 = vld [vmem:[%s0 + $0x98] sm:$0xff]
  %v28 = vld [vmem:[%s0 + $0xa0] sm:$0xff]
  %v29 = vld [vmem:[%s0 + $0xa8] sm:$0xff]
  %v30 = vld [vmem:[%s0 + $0xb0] sm:$0xff]
  %v31 = vld [vmem:[%s0 + $0xb8] sm:$0xff]
  %v32 = vld [vmem:[%s0 + $0xc0] sm:$0xff]
  %v33 = vld [vmem:[%s0 + $0xc8] sm:$0xff]
  %v34 = vld [vmem:[%s0 + $0xd0] sm:$0xff]
  %v35 = vld [vmem:[%s0 + $0xd8] sm:$0xff]
  %v36 = vld [vmem:[%s0 + $0xe0] sm:$0xff]
  %v37 = vld [vmem:[%s0 + $0xe8] sm:$0xff]
  %v38 = vld [vmem:[%s0 + $0xf0] sm:$0xff]
  %v39 = vld [vmem:[%s0 + $0xf8] sm:$0xff]
  %v40 = vld [vmem:[%s0 + $0x100] sm:$0xff]
  %v41 = vld [vmem:[%s0 + $0x108] sm:$0xff]
  %v42 = vld [vmem:[%s0 + $0x110] sm:$0xff]
  %v43 = vld [vmem:[%s0 + $0x118] sm:$0xff]
  %v44 = vld [vmem:[%s0 + $0x120] sm:$0xff]
  %v45 = vld [vmem:[%s0 + $0x128] sm:$0xff]
  %v46 = vld [vmem:[%s0 + $0x130] sm:$0xff]
  %v47 = vld [vmem:[%s0 + $0x138] sm:$0xff]
  %v48 = vld [vmem:[%s0 + $0x140] sm:$0xff]
  %v49 = vld [vmem:[%s0 + $0x148] sm:$0xff]
  %v50 = vld [vmem:[%s0 + $0x150] sm:$0xff]
  %v51 = vld [vmem:[%s0 + $0x158] sm:$0xff]
  %v52 = vld [vmem:[%s0 + $0x160] sm:$0xff]
  %v53 = vld [vmem:[%s0 + $0x168] sm:$0xff]
  %v54 = vld [vmem:[%s0 + $0x170] sm:$0xff]
  %v55 = vld [vmem:[%s0 + $0x178] sm:$0xff]
  %v56 = vld [vmem:[%s0 + $0x180] sm:$0xff]
  %v57 = vld [vmem:[%s0 + $0x188] sm:$0xff]
  %v58 = vld [vmem:[%s0 + $0x190] sm:$0xff]
  %v59 = vld [vmem:[%s0 + $0x198] sm:$0xff]
  %v60 = vld [vmem:[%s0 + $0x1a0] sm:$0xff]
  %v61 = vld [vmem:[%s0 + $0x1a8] sm:$0xff]
  %v62 = vld [vmem:[%s0 + $0x1b0] sm:$0xff]
  %v63 = vld [vmem:[%s0 + $0x1b8] sm:$0xff]
  %v64 = vld [vmem:[%s0 + $0x1c0] sm:$0xff]
  %v65 = vld [vmem:[%s0 + $0x1c8] sm:$0xff]
  %v66 = vld [vmem:[%s0 + $0x1d0] sm:$0xff]
  %v67 = vld [vmem:[%s0 + $0x1d8] sm:$0xff]
  %v68 = vld [vmem:[%s0 + $0x1e0] sm:$0xff]
  %v69 = vld [vmem:[%s0 + $0x1e8] sm:$0xff]
  %v70 = vld [vmem:[%s0 + $0x1f0] sm:$0xff]
  %v71 = vld [vmem:[%s0 + $0x1f8] sm:$0xff]
  %v72 = vld [vmem:[%s0 + $0x200] sm:$0xff]
  %v73 = vld [vmem:[%s0 + $0x208] sm:$0xff]
  %v74 = vld [vmem:[%s0 + $0x210] sm:$0xff]
  %v75 = vld [vmem:[%s0 + $0x218] sm:$0xff]
  %v76 = vld [vmem:[%s0 + $0x220] sm:$0xff]
  %v77 = vld [vmem:[%s0 + $0x228] sm:$0xff]
  %v78 = vld [vmem:[%s0 + $0x230] sm:$0xff]
  %v79 = vld [vmem:[%s0 + $0x238] sm:$0xff]
  %v80 = vld [vmem:[%s0 + $0x240] sm:$0xff]
  %v81 = vld [vmem:[%s0 + $0x248] sm:$0xff]
  %v82 = vld [vmem:[%s0 + $0x250] sm:$0xff]
  %v83 = vld [vmem:[%s0 + $0x258] sm:$0xff]
  %v84 = vld [vmem:[%s0 + $0x260] sm:$0xff]
  %v85 = vld [vmem:[%s0 + $0x268] sm:$0xff]
  %v86 = vld [vmem:[%s0 + $0x270] sm:$0xff]
  %v87 = vld [vmem:[%s0 + $0x278] sm:$0xff]
  %v88 = vld [vmem:[%s0 + $0x280] sm:$0xff]
  %v89 = vld [vmem:[%s0 + $0x288] sm:$0xff]
  %v90 = vld [vmem:[%s0 + $0x290] sm:$0xff]
  %v91 = vld [vmem:[%s0 + $0x298] sm:$0xff]
  %v92 = vld [vmem:[%s0 + $0x2a0] sm:$0xff]
  %v93 = vld [vmem:[%s0 + $0x2a8] sm:$0xff]
  %v94 = vld [vmem:[%s0 + $0x2b0] sm:$0xff]
  %v95 = vld [vmem:[%s0 + $0x2b8] sm:$0xff]
  %v96 = vld [vmem:[%s0 + $0x2c0] sm:$0xff]
  %v97 = vld [vmem:[%s0 + $0x2c8] sm:$0xff]
  %v98 = vld [vmem:[%s0 + $0x2d0] sm:$0xff]
  %v99 = vld [vmem:[%s0 + $0x2d8] sm:$0xff]
  %v100 = vld [vmem:[%s0 + $0x2e0] sm:$0xff]
  %v101 = vld [vmem:[%s0 + $0x2e8] sm:$0xff]
  %v102 = vld [vmem:[%s0 + $0x2f0] sm:$0xff]
  %v103 = vld [vmem:[%s0 + $0x2f8] sm:$0xff]
  %v104 = vld [vmem:[%s0 + $0x300] sm:$0xff]
  %v105 = vld [vmem:[%s0 + $0x308] sm:$0xff]
  %v106 = vld [vmem:[%s0 + $0x310] sm:$0xff]
  %v107 = vld [vmem:[%s0 + $0x318] sm:$0xff]
  %v108 = vld [vmem:[%s0 + $0x320] sm:$0xff]
  %v109 = vld [vmem:[%s0 + $0x328] sm:$0xff]
  %v110 = vld [vmem:[%s0 + $0x330] sm:$0xff]
  %v111 = vld [vmem:[%s0 + $0x338] sm:$0xff]
  %v112 = vld [vmem:[%s0 + $0x340] sm:$0xff]
  %v113 = vld [vmem:[%s0 + $0x348] sm:$0xff]
  %v114 = vld [vmem:[%s0 + $0x350] sm:$0xff]
  %v115 = vld [vmem:[%s0 + $0x358] sm:$0xff]
  %v116 = vld [vmem:[%s0 + $0x360] sm:$0xff]
  %v117 = vld [vmem:[%s0 + $0x368] sm:$0xff]
  %v118 = vld [vmem:[%s0 + $0x370] sm:$0xff]
  %v119 = vld [vmem:[%s0 + $0x378] sm:$0xff]
  %v120 = vld [vmem:[%s0 + $0x380] sm:$0xff]
  %v121 = vld [vmem:[%s0 + $0x388] sm:$0xff]
  %v122 = vld [vmem:[%s0 + $0x390] sm:$0xff]
  %v123 = vld [vmem:[%s0 + $0x398] sm:$0xff]
  %v124 = vld [vmem:[%s0 + $0x3a0] sm:$0xff]
  %v125 = vld [vmem:[%s0 + $0x3a8] sm:$0xff]
  %v126 = vld [vmem:[%s0 + $0x3b0] sm:$0xff]
  %v127 = vld [vmem:[%s0 + $0x3b8] sm:$0xff]
  %v128 = vld [vmem:[%s0 + $0x3c0] sm:$0xff]
  %v129 = vld [vmem:[%s0 + $0x3c8] sm:$0xff]
  %v130 = vld [vmem:[%s0 + $0x3d0] sm:$0xff]
  %v131 = vld [vmem:[%s0 + $0x3d8] sm:$0xff]
  %v132 = vld [vmem:[%s0 + $0x3e0] sm:$0xff]
  %v133 = vld [vmem:[%s0 + $0x3e8] sm:$0xff]
  %v134 = vld [vmem:[%s0 + $0x3f0] sm:$0xff]
  %v135 = vld [vmem:[%s0 + $0x3f8] sm:$0xff]
  %v136 = vunpack.c.l.bf16 %v8
  %v137 = vunpack.c.h.bf16 %v8
  %v138 = vunpack.c.l.bf16 %v9
  %v139 = vunpack.c.h.bf16 %v9
  %v140 = vunpack.c.l.bf16 %v10
  %v141 = vunpack.c.h.bf16 %v10
  %v142 = vunpack.c.l.bf16 %v11
  %v143 = vunpack.c.h.bf16 %v11
  %v144 = vunpack.c.l.bf16 %v12
  %v145 = vunpack.c.h.bf16 %v12
  %v146 = vunpack.c.l.bf16 %v13
  %v147 = vunpack.c.h.bf16 %v13
  %v148 = vunpack.c.l.bf16 %v14
  %v149 = vunpack.c.h.bf16 %v14
  %v150 = vunpack.c.l.bf16 %v15
  %v151 = vunpack.c.h.bf16 %v15
  %v152 = vunpack.c.l.bf16 %v16
  %v153 = vunpack.c.h.bf16 %v16
  %v154 = vunpack.c.l.bf16 %v17
  %v155 = vunpack.c.h.bf16 %v17
  %v156 = vunpack.c.l.bf16 %v18
  %v157 = vunpack.c.h.bf16 %v18
  %v158 = vunpack.c.l.bf16 %v19
  %v159 = vunpack.c.h.bf16 %v19
  %v160 = vunpack.c.l.bf16 %v20
  %v161 = vunpack.c.h.bf16 %v20
  %v162 = vunpack.c.l.bf16 %v21
  %v163 = vunpack.c.h.bf16 %v21
  %v164 = vunpack.c.l.bf16 %v22
  %v165 = vunpack.c.h.bf16 %v22
  %v166 = vunpack.c.l.bf16 %v23
  %v167 = vunpack.c.h.bf16 %v23
  %v168 = vunpack.c.l.bf16 %v24
  %v169 = vunpack.c.h.bf16 %v24
  %v170 = vunpack.c.l.bf16 %v25
  %v171 = vunpack.c.h.bf16 %v25
  %v172 = vunpack.c.l.bf16 %v26
  %v173 = vunpack.c.h.bf16 %v26
  %v174 = vunpack.c.l.bf16 %v27
  %v175 = vunpack.c.h.bf16 %v27
  %v176 = vunpack.c.l.bf16 %v28
  %v177 = vunpack.c.h.bf16 %v28
  %v178 = vunpack.c.l.bf16 %v29
  %v179 = vunpack.c.h.bf16 %v29
  %v180 = vunpack.c.l.bf16 %v30
  %v181 = vunpack.c.h.bf16 %v30
  %v182 = vunpack.c.l.bf16 %v31
  %v183 = vunpack.c.h.bf16 %v31
  %v184 = vunpack.c.l.bf16 %v32
  %v185 = vunpack.c.h.bf16 %v32
  %v186 = vunpack.c.l.bf16 %v33
  %v187 = vunpack.c.h.bf16 %v33
  %v188 = vunpack.c.l.bf16 %v34
  %v189 = vunpack.c.h.bf16 %v34
  %v190 = vunpack.c.l.bf16 %v35
  %v191 = vunpack.c.h.bf16 %v35
  %v192 = vunpack.c.l.bf16 %v36
  %v193 = vunpack.c.h.bf16 %v36
  %v194 = vunpack.c.l.bf16 %v37
  %v195 = vunpack.c.h.bf16 %v37
  %v196 = vunpack.c.l.bf16 %v38
  %v197 = vunpack.c.h.bf16 %v38
  %v198 = vunpack.c.l.bf16 %v39
  %v199 = vunpack.c.h.bf16 %v39
  %v200 = vunpack.c.l.bf16 %v40
  %v201 = vunpack.c.h.bf16 %v40
  %v202 = vunpack.c.l.bf16 %v41
  %v203 = vunpack.c.h.bf16 %v41
  %v204 = vunpack.c.l.bf16 %v42
  %v205 = vunpack.c.h.bf16 %v42
  %v206 = vunpack.c.l.bf16 %v43
  %v207 = vunpack.c.h.bf16 %v43
  %v208 = vunpack.c.l.bf16 %v44
  %v209 = vunpack.c.h.bf16 %v44
  %v210 = vunpack.c.l.bf16 %v45
  %v211 = vunpack.c.h.bf16 %v45
  %v212 = vunpack.c.l.bf16 %v46
  %v213 = vunpack.c.h.bf16 %v46
  %v214 = vunpack.c.l.bf16 %v47
  %v215 = vunpack.c.h.bf16 %v47
  %v216 = vunpack.c.l.bf16 %v48
  %v217 = vunpack.c.h.bf16 %v48
  %v218 = vunpack.c.l.bf16 %v49
  %v219 = vunpack.c.h.bf16 %v49
  %v220 = vunpack.c.l.bf16 %v50
  %v221 = vunpack.c.h.bf16 %v50
  %v222 = vunpack.c.l.bf16 %v51
  %v223 = vunpack.c.h.bf16 %v51
  %v224 = vunpack.c.l.bf16 %v52
  %v225 = vunpack.c.h.bf16 %v52
  %v226 = vunpack.c.l.bf16 %v53
  %v227 = vunpack.c.h.bf16 %v53
  %v228 = vunpack.c.l.bf16 %v54
  %v229 = vunpack.c.h.bf16 %v54
  %v230 = vunpack.c.l.bf16 %v55
  %v231 = vunpack.c.h.bf16 %v55
  %v232 = vunpack.c.l.bf16 %v56
  %v233 = vunpack.c.h.bf16 %v56
  %v234 = vunpack.c.l.bf16 %v57
  %v235 = vunpack.c.h.bf16 %v57
  %v236 = vunpack.c.l.bf16 %v58
  %v237 = vunpack.c.h.bf16 %v58
  %v238 = vunpack.c.l.bf16 %v59
  %v239 = vunpack.c.h.bf16 %v59
  %v240 = vunpack.c.l.bf16 %v60
  %v241 = vunpack.c.h.bf16 %v60
  %v242 = vunpack.c.l.bf16 %v61
  %v243 = vunpack.c.h.bf16 %v61
  %v244 = vunpack.c.l.bf16 %v62
  %v245 = vunpack.c.h.bf16 %v62
  %v246 = vunpack.c.l.bf16 %v63
  %v247 = vunpack.c.h.bf16 %v63
  %v248 = vunpack.c.l.bf16 %v64
  %v249 = vunpack.c.h.bf16 %v64
  %v250 = vunpack.c.l.bf16 %v65
  %v251 = vunpack.c.h.bf16 %v65
  %v252 = vunpack.c.l.bf16 %v66
  %v253 = vunpack.c.h.bf16 %v66
  %v254 = vunpack.c.l.bf16 %v67
  %v255 = vunpack.c.h.bf16 %v67
  %v256 = vunpack.c.l.bf16 %v68
  %v257 = vunpack.c.h.bf16 %v68
  %v258 = vunpack.c.l.bf16 %v69
  %v259 = vunpack.c.h.bf16 %v69
  %v260 = vunpack.c.l.bf16 %v70
  %v261 = vunpack.c.h.bf16 %v70
  %v262 = vunpack.c.l.bf16 %v71
  %v263 = vunpack.c.h.bf16 %v71
  %v264 = vunpack.c.l.bf16 %v72
  %v265 = vunpack.c.h.bf16 %v72
  %v266 = vunpack.c.l.bf16 %v73
  %v267 = vunpack.c.h.bf16 %v73
  %v268 = vunpack.c.l.bf16 %v74
  %v269 = vunpack.c.h.bf16 %v74
  %v270 = vunpack.c.l.bf16 %v75
  %v271 = vunpack.c.h.bf16 %v75
  %v272 = vunpack.c.l.bf16 %v76
  %v273 = vunpack.c.h.bf16 %v76
  %v274 = vunpack.c.l.bf16 %v77
  %v275 = vunpack.c.h.bf16 %v77
  %v276 = vunpack.c.l.bf16 %v78
  %v277 = vunpack.c.h.bf16 %v78
  %v278 = vunpack.c.l.bf16 %v79
  %v279 = vunpack.c.h.bf16 %v79
  %v280 = vunpack.c.l.bf16 %v80
  %v281 = vunpack.c.h.bf16 %v80
  %v282 = vunpack.c.l.bf16 %v81
  %v283 = vunpack.c.h.bf16 %v81
  %v284 = vunpack.c.l.bf16 %v82
  %v285 = vunpack.c.h.bf16 %v82
  %v286 = vunpack.c.l.bf16 %v83
  %v287 = vunpack.c.h.bf16 %v83
  %v288 = vunpack.c.l.bf16 %v84
  %v289 = vunpack.c.h.bf16 %v84
  %v290 = vunpack.c.l.bf16 %v85
  %v291 = vunpack.c.h.bf16 %v85
  %v292 = vunpack.c.l.bf16 %v86
  %v293 = vunpack.c.h.bf16 %v86
  %v294 = vunpack.c.l.bf16 %v87
  %v295 = vunpack.c.h.bf16 %v87
  %v296 = vunpack.c.l.bf16 %v88
  %v297 = vunpack.c.h.bf16 %v88
  %v298 = vunpack.c.l.bf16 %v89
  %v299 = vunpack.c.h.bf16 %v89
  %v300 = vunpack.c.l.bf16 %v90
  %v301 = vunpack.c.h.bf16 %v90
  %v302 = vunpack.c.l.bf16 %v91
  %v303 = vunpack.c.h.bf16 %v91
  %v304 = vunpack.c.l.bf16 %v92
  %v305 = vunpack.c.h.bf16 %v92
  %v306 = vunpack.c.l.bf16 %v93
  %v307 = vunpack.c.h.bf16 %v93
  %v308 = vunpack.c.l.bf16 %v94
  %v309 = vunpack.c.h.bf16 %v94
  %v310 = vunpack.c.l.bf16 %v95
  %v311 = vunpack.c.h.bf16 %v95
  %v312 = vunpack.c.l.bf16 %v96
  %v313 = vunpack.c.h.bf16 %v96
  %v314 = vunpack.c.l.bf16 %v97
  %v315 = vunpack.c.h.bf16 %v97
  %v316 = vunpack.c.l.bf16 %v98
  %v317 = vunpack.c.h.bf16 %v98
  %v318 = vunpack.c.l.bf16 %v99
  %v319 = vunpack.c.h.bf16 %v99
  %v320 = vunpack.c.l.bf16 %v100
  %v321 = vunpack.c.h.bf16 %v100
  %v322 = vunpack.c.l.bf16 %v101
  %v323 = vunpack.c.h.bf16 %v101
  %v324 = vunpack.c.l.bf16 %v102
  %v325 = vunpack.c.h.bf16 %v102
  %v326 = vunpack.c.l.bf16 %v103
  %v327 = vunpack.c.h.bf16 %v103
  %v328 = vunpack.c.l.bf16 %v104
  %v329 = vunpack.c.h.bf16 %v104
  %v330 = vunpack.c.l.bf16 %v105
  %v331 = vunpack.c.h.bf16 %v105
  %v332 = vunpack.c.l.bf16 %v106
  %v333 = vunpack.c.h.bf16 %v106
  %v334 = vunpack.c.l.bf16 %v107
  %v335 = vunpack.c.h.bf16 %v107
  %v336 = vunpack.c.l.bf16 %v108
  %v337 = vunpack.c.h.bf16 %v108
  %v338 = vunpack.c.l.bf16 %v109
  %v339 = vunpack.c.h.bf16 %v109
  %v340 = vunpack.c.l.bf16 %v110
  %v341 = vunpack.c.h.bf16 %v110
  %v342 = vunpack.c.l.bf16 %v111
  %v343 = vunpack.c.h.bf16 %v111
  %v344 = vunpack.c.l.bf16 %v112
  %v345 = vunpack.c.h.bf16 %v112
  %v346 = vunpack.c.l.bf16 %v113
  %v347 = vunpack.c.h.bf16 %v113
  %v348 = vunpack.c.l.bf16 %v114
  %v349 = vunpack.c.h.bf16 %v114
  %v350 = vunpack.c.l.bf16 %v115
  %v351 = vunpack.c.h.bf16 %v115
  %v352 = vunpack.c.l.bf16 %v116
  %v353 = vunpack.c.h.bf16 %v116
  %v354 = vunpack.c.l.bf16 %v117
  %v355 = vunpack.c.h.bf16 %v117
  %v356 = vunpack.c.l.bf16 %v118
  %v357 = vunpack.c.h.bf16 %v118
  %v358 = vunpack.c.l.bf16 %v119
  %v359 = vunpack.c.h.bf16 %v119
  %v360 = vunpack.c.l.bf16 %v120
  %v361 = vunpack.c.h.bf16 %v120
  %v362 = vunpack.c.l.bf16 %v121
  %v363 = vunpack.c.h.bf16 %v121
  %v364 = vunpack.c.l.bf16 %v122
  %v365 = vunpack.c.h.bf16 %v122
  %v366 = vunpack.c.l.bf16 %v123
  %v367 = vunpack.c.h.bf16 %v123
  %v368 = vunpack.c.l.bf16 %v124
  %v369 = vunpack.c.h.bf16 %v124
  %v370 = vunpack.c.l.bf16 %v125
  %v371 = vunpack.c.h.bf16 %v125
  %v372 = vunpack.c.l.bf16 %v126
  %v373 = vunpack.c.h.bf16 %v126
  %v374 = vunpack.c.l.bf16 %v127
  %v375 = vunpack.c.h.bf16 %v127
  %v376 = vunpack.c.l.bf16 %v128
  %v377 = vunpack.c.h.bf16 %v128
  %v378 = vunpack.c.l.bf16 %v129
  %v379 = vunpack.c.h.bf16 %v129
  %v380 = vunpack.c.l.bf16 %v130
  %v381 = vunpack.c.h.bf16 %v130
  %v382 = vunpack.c.l.bf16 %v131
  %v383 = vunpack.c.h.bf16 %v131
  %v384 = vunpack.c.l.bf16 %v132
  %v385 = vunpack.c.h.bf16 %v132
  %v386 = vunpack.c.l.bf16 %v133
  %v387 = vunpack.c.h.bf16 %v133
  %v388 = vunpack.c.l.bf16 %v134
  %v389 = vunpack.c.h.bf16 %v134
  %v390 = vunpack.c.l.bf16 %v135
  %v391 = vunpack.c.h.bf16 %v135
  %v392 = vmul.f32 %v136, %v136
  %v393 = vmul.f32 %v137, %v137
  %v394 = vmul.f32 %v138, %v138
  %v395 = vmul.f32 %v139, %v139
  %v396 = vmul.f32 %v140, %v140
  %v397 = vmul.f32 %v141, %v141
  %v398 = vmul.f32 %v142, %v142
  %v399 = vmul.f32 %v143, %v143
  %v400 = vmul.f32 %v144, %v144
  %v401 = vmul.f32 %v145, %v145
  %v402 = vmul.f32 %v146, %v146
  %v403 = vmul.f32 %v147, %v147
  %v404 = vmul.f32 %v148, %v148
  %v405 = vmul.f32 %v149, %v149
  %v406 = vmul.f32 %v150, %v150
  %v407 = vmul.f32 %v151, %v151
  %v408 = vmul.f32 %v152, %v152
  %v409 = vmul.f32 %v153, %v153
  %v410 = vmul.f32 %v154, %v154
  %v411 = vmul.f32 %v155, %v155
  %v412 = vmul.f32 %v156, %v156
  %v413 = vmul.f32 %v157, %v157
  %v414 = vmul.f32 %v158, %v158
  %v415 = vmul.f32 %v159, %v159
  %v416 = vmul.f32 %v160, %v160
  %v417 = vmul.f32 %v161, %v161
  %v418 = vmul.f32 %v162, %v162
  %v419 = vmul.f32 %v163, %v163
  %v420 = vmul.f32 %v164, %v164
  %v421 = vmul.f32 %v165, %v165
  %v422 = vmul.f32 %v166, %v166
  %v423 = vmul.f32 %v167, %v167
  %v424 = vmul.f32 %v168, %v168
  %v425 = vmul.f32 %v169, %v169
  %v426 = vmul.f32 %v170, %v170
  %v427 = vmul.f32 %v171, %v171
  %v428 = vmul.f32 %v172, %v172
  %v429 = vmul.f32 %v173, %v173
  %v430 = vmul.f32 %v174, %v174
  %v431 = vmul.f32 %v175, %v175
  %v432 = vmul.f32 %v176, %v176
  %v433 = vmul.f32 %v177, %v177
  %v434 = vmul.f32 %v178, %v178
  %v435 = vmul.f32 %v179, %v179
  %v436 = vmul.f32 %v180, %v180
  %v437 = vmul.f32 %v181, %v181
  %v438 = vmul.f32 %v182, %v182
  %v439 = vmul.f32 %v183, %v183
  %v440 = vmul.f32 %v184, %v184
  %v441 = vmul.f32 %v185, %v185
  %v442 = vmul.f32 %v186, %v186
  %v443 = vmul.f32 %v187, %v187
  %v444 = vmul.f32 %v188, %v188
  %v445 = vmul.f32 %v189, %v189
  %v446 = vmul.f32 %v190, %v190
  %v447 = vmul.f32 %v191, %v191
  %v448 = vmul.f32 %v192, %v192
  %v449 = vmul.f32 %v193, %v193
  %v450 = vmul.f32 %v194, %v194
  %v451 = vmul.f32 %v195, %v195
  %v452 = vmul.f32 %v196, %v196
  %v453 = vmul.f32 %v197, %v197
  %v454 = vmul.f32 %v198, %v198
  %v455 = vmul.f32 %v199, %v199
  %v456 = vmul.f32 %v200, %v200
  %v457 = vmul.f32 %v201, %v201
  %v458 = vmul.f32 %v202, %v202
  %v459 = vmul.f32 %v203, %v203
  %v460 = vmul.f32 %v204, %v204
  %v461 = vmul.f32 %v205, %v205
  %v462 = vmul.f32 %v206, %v206
  %v463 = vmul.f32 %v207, %v207
  %v464 = vmul.f32 %v208, %v208
  %v465 = vmul.f32 %v209, %v209
  %v466 = vmul.f32 %v210, %v210
  %v467 = vmul.f32 %v211, %v211
  %v468 = vmul.f32 %v212, %v212
  %v469 = vmul.f32 %v213, %v213
  %v470 = vmul.f32 %v214, %v214
  %v471 = vmul.f32 %v215, %v215
  %v472 = vmul.f32 %v216, %v216
  %v473 = vmul.f32 %v217, %v217
  %v474 = vmul.f32 %v218, %v218
  %v475 = vmul.f32 %v219, %v219
  %v476 = vmul.f32 %v220, %v220
  %v477 = vmul.f32 %v221, %v221
  %v478 = vmul.f32 %v222, %v222
  %v479 = vmul.f32 %v223, %v223
  %v480 = vmul.f32 %v224, %v224
  %v481 = vmul.f32 %v225, %v225
  %v482 = vmul.f32 %v226, %v226
  %v483 = vmul.f32 %v227, %v227
  %v484 = vmul.f32 %v228, %v228
  %v485 = vmul.f32 %v229, %v229
  %v486 = vmul.f32 %v230, %v230
  %v487 = vmul.f32 %v231, %v231
  %v488 = vmul.f32 %v232, %v232
  %v489 = vmul.f32 %v233, %v233
  %v490 = vmul.f32 %v234, %v234
  %v491 = vmul.f32 %v235, %v235
  %v492 = vmul.f32 %v236, %v236
  %v493 = vmul.f32 %v237, %v237
  %v494 = vmul.f32 %v238, %v238
  %v495 = vmul.f32 %v239, %v239
  %v496 = vmul.f32 %v240, %v240
  %v497 = vmul.f32 %v241, %v241
  %v498 = vmul.f32 %v242, %v242
  %v499 = vmul.f32 %v243, %v243
  %v500 = vmul.f32 %v244, %v244
  %v501 = vmul.f32 %v245, %v245
  %v502 = vmul.f32 %v246, %v246
  %v503 = vmul.f32 %v247, %v247
  %v504 = vmul.f32 %v248, %v248
  %v505 = vmul.f32 %v249, %v249
  %v506 = vmul.f32 %v250, %v250
  %v507 = vmul.f32 %v251, %v251
  %v508 = vmul.f32 %v252, %v252
  %v509 = vmul.f32 %v253, %v253
  %v510 = vmul.f32 %v254, %v254
  %v511 = vmul.f32 %v255, %v255
  %v512 = vmul.f32 %v256, %v256
  %v513 = vmul.f32 %v257, %v257
  %v514 = vmul.f32 %v258, %v258
  %v515 = vmul.f32 %v259, %v259
  %v516 = vmul.f32 %v260, %v260
  %v517 = vmul.f32 %v261, %v261
  %v518 = vmul.f32 %v262, %v262
  %v519 = vmul.f32 %v263, %v263
  %v520 = vmul.f32 %v264, %v264
  %v521 = vmul.f32 %v265, %v265
  %v522 = vmul.f32 %v266, %v266
  %v523 = vmul.f32 %v267, %v267
  %v524 = vmul.f32 %v268, %v268
  %v525 = vmul.f32 %v269, %v269
  %v526 = vmul.f32 %v270, %v270
  %v527 = vmul.f32 %v271, %v271
  %v528 = vmul.f32 %v272, %v272
  %v529 = vmul.f32 %v273, %v273
  %v530 = vmul.f32 %v274, %v274
  %v531 = vmul.f32 %v275, %v275
  %v532 = vmul.f32 %v276, %v276
  %v533 = vmul.f32 %v277, %v277
  %v534 = vmul.f32 %v278, %v278
  %v535 = vmul.f32 %v279, %v279
  %v536 = vmul.f32 %v280, %v280
  %v537 = vmul.f32 %v281, %v281
  %v538 = vmul.f32 %v282, %v282
  %v539 = vmul.f32 %v283, %v283
  %v540 = vmul.f32 %v284, %v284
  %v541 = vmul.f32 %v285, %v285
  %v542 = vmul.f32 %v286, %v286
  %v543 = vmul.f32 %v287, %v287
  %v544 = vmul.f32 %v288, %v288
  %v545 = vmul.f32 %v289, %v289
  %v546 = vmul.f32 %v290, %v290
  %v547 = vmul.f32 %v291, %v291
  %v548 = vmul.f32 %v292, %v292
  %v549 = vmul.f32 %v293, %v293
  %v550 = vmul.f32 %v294, %v294
  %v551 = vmul.f32 %v295, %v295
  %v552 = vmul.f32 %v296, %v296
  %v553 = vmul.f32 %v297, %v297
  %v554 = vmul.f32 %v298, %v298
  %v555 = vmul.f32 %v299, %v299
  %v556 = vmul.f32 %v300, %v300
  %v557 = vmul.f32 %v301, %v301
  %v558 = vmul.f32 %v302, %v302
  %v559 = vmul.f32 %v303, %v303
  %v560 = vmul.f32 %v304, %v304
  %v561 = vmul.f32 %v305, %v305
  %v562 = vmul.f32 %v306, %v306
  %v563 = vmul.f32 %v307, %v307
  %v564 = vmul.f32 %v308, %v308
  %v565 = vmul.f32 %v309, %v309
  %v566 = vmul.f32 %v310, %v310
  %v567 = vmul.f32 %v311, %v311
  %v568 = vmul.f32 %v312, %v312
  %v569 = vmul.f32 %v313, %v313
  %v570 = vmul.f32 %v314, %v314
  %v571 = vmul.f32 %v315, %v315
  %v572 = vmul.f32 %v316, %v316
  %v573 = vmul.f32 %v317, %v317
  %v574 = vmul.f32 %v318, %v318
  %v575 = vmul.f32 %v319, %v319
  %v576 = vmul.f32 %v320, %v320
  %v577 = vmul.f32 %v321, %v321
  %v578 = vmul.f32 %v322, %v322
  %v579 = vmul.f32 %v323, %v323
  %v580 = vmul.f32 %v324, %v324
  %v581 = vmul.f32 %v325, %v325
  %v582 = vmul.f32 %v326, %v326
  %v583 = vmul.f32 %v327, %v327
  %v584 = vmul.f32 %v328, %v328
  %v585 = vmul.f32 %v329, %v329
  %v586 = vmul.f32 %v330, %v330
  %v587 = vmul.f32 %v331, %v331
  %v588 = vmul.f32 %v332, %v332
  %v589 = vmul.f32 %v333, %v333
  %v590 = vmul.f32 %v334, %v334
  %v591 = vmul.f32 %v335, %v335
  %v592 = vmul.f32 %v336, %v336
  %v593 = vmul.f32 %v337, %v337
  %v594 = vmul.f32 %v338, %v338
  %v595 = vmul.f32 %v339, %v339
  %v596 = vmul.f32 %v340, %v340
  %v597 = vmul.f32 %v341, %v341
  %v598 = vmul.f32 %v342, %v342
  %v599 = vmul.f32 %v343, %v343
  %v600 = vmul.f32 %v344, %v344
  %v601 = vmul.f32 %v345, %v345
  %v602 = vmul.f32 %v346, %v346
  %v603 = vmul.f32 %v347, %v347
  %v604 = vmul.f32 %v348, %v348
  %v605 = vmul.f32 %v349, %v349
  %v606 = vmul.f32 %v350, %v350
  %v607 = vmul.f32 %v351, %v351
  %v608 = vmul.f32 %v352, %v352
  %v609 = vmul.f32 %v353, %v353
  %v610 = vmul.f32 %v354, %v354
  %v611 = vmul.f32 %v355, %v355
  %v612 = vmul.f32 %v356, %v356
  %v613 = vmul.f32 %v357, %v357
  %v614 = vmul.f32 %v358, %v358
  %v615 = vmul.f32 %v359, %v359
  %v616 = vmul.f32 %v360, %v360
  %v617 = vmul.f32 %v361, %v361
  %v618 = vmul.f32 %v362, %v362
  %v619 = vmul.f32 %v363, %v363
  %v620 = vmul.f32 %v364, %v364
  %v621 = vmul.f32 %v365, %v365
  %v622 = vmul.f32 %v366, %v366
  %v623 = vmul.f32 %v367, %v367
  %v624 = vmul.f32 %v368, %v368
  %v625 = vmul.f32 %v369, %v369
  %v626 = vmul.f32 %v370, %v370
  %v627 = vmul.f32 %v371, %v371
  %v628 = vmul.f32 %v372, %v372
  %v629 = vmul.f32 %v373, %v373
  %v630 = vmul.f32 %v374, %v374
  %v631 = vmul.f32 %v375, %v375
  %v632 = vmul.f32 %v376, %v376
  %v633 = vmul.f32 %v377, %v377
  %v634 = vmul.f32 %v378, %v378
  %v635 = vmul.f32 %v379, %v379
  %v636 = vmul.f32 %v380, %v380
  %v637 = vmul.f32 %v381, %v381
  %v638 = vmul.f32 %v382, %v382
  %v639 = vmul.f32 %v383, %v383
  %v640 = vmul.f32 %v384, %v384
  %v641 = vmul.f32 %v385, %v385
  %v642 = vmul.f32 %v386, %v386
  %v643 = vmul.f32 %v387, %v387
  %v644 = vmul.f32 %v388, %v388
  %v645 = vmul.f32 %v389, %v389
  %v646 = vmul.f32 %v390, %v390
  %v647 = vmul.f32 %v391, %v391
  %v648 = vadd.f32 %v392, %v400
  %v649 = vadd.f32 %v648, %v408
  %v650 = vadd.f32 %v649, %v416
  %v651 = vadd.f32 %v650, %v424
  %v652 = vadd.f32 %v651, %v432
  %v653 = vadd.f32 %v652, %v440
  %v654 = vadd.f32 %v653, %v448
  %v655 = vadd.f32 %v654, %v456
  %v656 = vadd.f32 %v655, %v464
  %v657 = vadd.f32 %v656, %v472
  %v658 = vadd.f32 %v657, %v480
  %v659 = vadd.f32 %v658, %v488
  %v660 = vadd.f32 %v659, %v496
  %v661 = vadd.f32 %v660, %v504
  %v662 = vadd.f32 %v661, %v512
  %v663 = vadd.f32 %v662, %v520
  %v664 = vadd.f32 %v663, %v528
  %v665 = vadd.f32 %v664, %v536
  %v666 = vadd.f32 %v665, %v544
  %v667 = vadd.f32 %v666, %v552
  %v668 = vadd.f32 %v667, %v560
  %v669 = vadd.f32 %v668, %v568
  %v670 = vadd.f32 %v669, %v576
  %v671 = vadd.f32 %v670, %v584
  %v672 = vadd.f32 %v671, %v592
  %v673 = vadd.f32 %v672, %v600
  %v674 = vadd.f32 %v673, %v608
  %v675 = vadd.f32 %v674, %v616
  %v676 = vadd.f32 %v675, %v624
  %v677 = vadd.f32 %v676, %v632
  %v678 = vadd.f32 %v677, %v640
  %v679 = vrot.slane %v678, 4
  %v680 = vadd.f32 %v678, %v679
  %v681 = vrot.slane %v680, 2
  %v682 = vadd.f32 %v680, %v681
  %v683 = vrot.slane %v682, 1
  %v684 = vadd.f32 %v682, %v683
  %v685 = vadd.f32 %v393, %v401
  %v686 = vadd.f32 %v685, %v409
  %v687 = vadd.f32 %v686, %v417
  %v688 = vadd.f32 %v687, %v425
  %v689 = vadd.f32 %v688, %v433
  %v690 = vadd.f32 %v689, %v441
  %v691 = vadd.f32 %v690, %v449
  %v692 = vadd.f32 %v691, %v457
  %v693 = vadd.f32 %v692, %v465
  %v694 = vadd.f32 %v693, %v473
  %v695 = vadd.f32 %v694, %v481
  %v696 = vadd.f32 %v695, %v489
  %v697 = vadd.f32 %v696, %v497
  %v698 = vadd.f32 %v697, %v505
  %v699 = vadd.f32 %v698, %v513
  %v700 = vadd.f32 %v699, %v521
  %v701 = vadd.f32 %v700, %v529
  %v702 = vadd.f32 %v701, %v537
  %v703 = vadd.f32 %v702, %v545
  %v704 = vadd.f32 %v703, %v553
  %v705 = vadd.f32 %v704, %v561
  %v706 = vadd.f32 %v705, %v569
  %v707 = vadd.f32 %v706, %v577
  %v708 = vadd.f32 %v707, %v585
  %v709 = vadd.f32 %v708, %v593
  %v710 = vadd.f32 %v709, %v601
  %v711 = vadd.f32 %v710, %v609
  %v712 = vadd.f32 %v711, %v617
  %v713 = vadd.f32 %v712, %v625
  %v714 = vadd.f32 %v713, %v633
  %v715 = vadd.f32 %v714, %v641
  %v716 = vrot.slane %v715, 4
  %v717 = vadd.f32 %v715, %v716
  %v718 = vrot.slane %v717, 2
  %v719 = vadd.f32 %v717, %v718
  %v720 = vrot.slane %v719, 1
  %v721 = vadd.f32 %v719, %v720
  %v722 = vadd.f32 %v394, %v402
  %v723 = vadd.f32 %v722, %v410
  %v724 = vadd.f32 %v723, %v418
  %v725 = vadd.f32 %v724, %v426
  %v726 = vadd.f32 %v725, %v434
  %v727 = vadd.f32 %v726, %v442
  %v728 = vadd.f32 %v727, %v450
  %v729 = vadd.f32 %v728, %v458
  %v730 = vadd.f32 %v729, %v466
  %v731 = vadd.f32 %v730, %v474
  %v732 = vadd.f32 %v731, %v482
  %v733 = vadd.f32 %v732, %v490
  %v734 = vadd.f32 %v733, %v498
  %v735 = vadd.f32 %v734, %v506
  %v736 = vadd.f32 %v735, %v514
  %v737 = vadd.f32 %v736, %v522
  %v738 = vadd.f32 %v737, %v530
  %v739 = vadd.f32 %v738, %v538
  %v740 = vadd.f32 %v739, %v546
  %v741 = vadd.f32 %v740, %v554
  %v742 = vadd.f32 %v741, %v562
  %v743 = vadd.f32 %v742, %v570
  %v744 = vadd.f32 %v743, %v578
  %v745 = vadd.f32 %v744, %v586
  %v746 = vadd.f32 %v745, %v594
  %v747 = vadd.f32 %v746, %v602
  %v748 = vadd.f32 %v747, %v610
  %v749 = vadd.f32 %v748, %v618
  %v750 = vadd.f32 %v749, %v626
  %v751 = vadd.f32 %v750, %v634
  %v752 = vadd.f32 %v751, %v642
  %v753 = vrot.slane %v752, 4
  %v754 = vadd.f32 %v752, %v753
  %v755 = vrot.slane %v754, 2
  %v756 = vadd.f32 %v754, %v755
  %v757 = vrot.slane %v756, 1
  %v758 = vadd.f32 %v756, %v757
  %v759 = vadd.f32 %v395, %v403
  %v760 = vadd.f32 %v759, %v411
  %v761 = vadd.f32 %v760, %v419
  %v762 = vadd.f32 %v761, %v427
  %v763 = vadd.f32 %v762, %v435
  %v764 = vadd.f32 %v763, %v443
  %v765 = vadd.f32 %v764, %v451
  %v766 = vadd.f32 %v765, %v459
  %v767 = vadd.f32 %v766, %v467
  %v768 = vadd.f32 %v767, %v475
  %v769 = vadd.f32 %v768, %v483
  %v770 = vadd.f32 %v769, %v491
  %v771 = vadd.f32 %v770, %v499
  %v772 = vadd.f32 %v771, %v507
  %v773 = vadd.f32 %v772, %v515
  %v774 = vadd.f32 %v773, %v523
  %v775 = vadd.f32 %v774, %v531
  %v776 = vadd.f32 %v775, %v539
  %v777 = vadd.f32 %v776, %v547
  %v778 = vadd.f32 %v777, %v555
  %v779 = vadd.f32 %v778, %v563
  %v780 = vadd.f32 %v779, %v571
  %v781 = vadd.f32 %v780, %v579
  %v782 = vadd.f32 %v781, %v587
  %v783 = vadd.f32 %v782, %v595
  %v784 = vadd.f32 %v783, %v603
  %v785 = vadd.f32 %v784, %v611
  %v786 = vadd.f32 %v785, %v619
  %v787 = vadd.f32 %v786, %v627
  %v788 = vadd.f32 %v787, %v635
  %v789 = vadd.f32 %v788, %v643
  %v790 = vrot.slane %v789, 4
  %v791 = vadd.f32 %v789, %v790
  %v792 = vrot.slane %v791, 2
  %v793 = vadd.f32 %v791, %v792
  %v794 = vrot.slane %v793, 1
  %v795 = vadd.f32 %v793, %v794
  %v796 = vadd.f32 %v396, %v404
  %v797 = vadd.f32 %v796, %v412
  %v798 = vadd.f32 %v797, %v420
  %v799 = vadd.f32 %v798, %v428
  %v800 = vadd.f32 %v799, %v436
  %v801 = vadd.f32 %v800, %v444
  %v802 = vadd.f32 %v801, %v452
  %v803 = vadd.f32 %v802, %v460
  %v804 = vadd.f32 %v803, %v468
  %v805 = vadd.f32 %v804, %v476
  %v806 = vadd.f32 %v805, %v484
  %v807 = vadd.f32 %v806, %v492
  %v808 = vadd.f32 %v807, %v500
  %v809 = vadd.f32 %v808, %v508
  %v810 = vadd.f32 %v809, %v516
  %v811 = vadd.f32 %v810, %v524
  %v812 = vadd.f32 %v811, %v532
  %v813 = vadd.f32 %v812, %v540
  %v814 = vadd.f32 %v813, %v548
  %v815 = vadd.f32 %v814, %v556
  %v816 = vadd.f32 %v815, %v564
  %v817 = vadd.f32 %v816, %v572
  %v818 = vadd.f32 %v817, %v580
  %v819 = vadd.f32 %v818, %v588
  %v820 = vadd.f32 %v819, %v596
  %v821 = vadd.f32 %v820, %v604
  %v822 = vadd.f32 %v821, %v612
  %v823 = vadd.f32 %v822, %v620
  %v824 = vadd.f32 %v823, %v628
  %v825 = vadd.f32 %v824, %v636
  %v826 = vadd.f32 %v825, %v644
  %v827 = vrot.slane %v826, 4
  %v828 = vadd.f32 %v826, %v827
  %v829 = vrot.slane %v828, 2
  %v830 = vadd.f32 %v828, %v829
  %v831 = vrot.slane %v830, 1
  %v832 = vadd.f32 %v830, %v831
  %v833 = vadd.f32 %v397, %v405
  %v834 = vadd.f32 %v833, %v413
  %v835 = vadd.f32 %v834, %v421
  %v836 = vadd.f32 %v835, %v429
  %v837 = vadd.f32 %v836, %v437
  %v838 = vadd.f32 %v837, %v445
  %v839 = vadd.f32 %v838, %v453
  %v840 = vadd.f32 %v839, %v461
  %v841 = vadd.f32 %v840, %v469
  %v842 = vadd.f32 %v841, %v477
  %v843 = vadd.f32 %v842, %v485
  %v844 = vadd.f32 %v843, %v493
  %v845 = vadd.f32 %v844, %v501
  %v846 = vadd.f32 %v845, %v509
  %v847 = vadd.f32 %v846, %v517
  %v848 = vadd.f32 %v847, %v525
  %v849 = vadd.f32 %v848, %v533
  %v850 = vadd.f32 %v849, %v541
  %v851 = vadd.f32 %v850, %v549
  %v852 = vadd.f32 %v851, %v557
  %v853 = vadd.f32 %v852, %v565
  %v854 = vadd.f32 %v853, %v573
  %v855 = vadd.f32 %v854, %v581
  %v856 = vadd.f32 %v855, %v589
  %v857 = vadd.f32 %v856, %v597
  %v858 = vadd.f32 %v857, %v605
  %v859 = vadd.f32 %v858, %v613
  %v860 = vadd.f32 %v859, %v621
  %v861 = vadd.f32 %v860, %v629
  %v862 = vadd.f32 %v861, %v637
  %v863 = vadd.f32 %v862, %v645
  %v864 = vrot.slane %v863, 4
  %v865 = vadd.f32 %v863, %v864
  %v866 = vrot.slane %v865, 2
  %v867 = vadd.f32 %v865, %v866
  %v868 = vrot.slane %v867, 1
  %v869 = vadd.f32 %v867, %v868
  %v870 = vadd.f32 %v398, %v406
  %v871 = vadd.f32 %v870, %v414
  %v872 = vadd.f32 %v871, %v422
  %v873 = vadd.f32 %v872, %v430
  %v874 = vadd.f32 %v873, %v438
  %v875 = vadd.f32 %v874, %v446
  %v876 = vadd.f32 %v875, %v454
  %v877 = vadd.f32 %v876, %v462
  %v878 = vadd.f32 %v877, %v470
  %v879 = vadd.f32 %v878, %v478
  %v880 = vadd.f32 %v879, %v486
  %v881 = vadd.f32 %v880, %v494
  %v882 = vadd.f32 %v881, %v502
  %v883 = vadd.f32 %v882, %v510
  %v884 = vadd.f32 %v883, %v518
  %v885 = vadd.f32 %v884, %v526
  %v886 = vadd.f32 %v885, %v534
  %v887 = vadd.f32 %v886, %v542
  %v888 = vadd.f32 %v887, %v550
  %v889 = vadd.f32 %v888, %v558
  %v890 = vadd.f32 %v889, %v566
  %v891 = vadd.f32 %v890, %v574
  %v892 = vadd.f32 %v891, %v582
  %v893 = vadd.f32 %v892, %v590
  %v894 = vadd.f32 %v893, %v598
  %v895 = vadd.f32 %v894, %v606
  %v896 = vadd.f32 %v895, %v614
  %v897 = vadd.f32 %v896, %v622
  %v898 = vadd.f32 %v897, %v630
  %v899 = vadd.f32 %v898, %v638
  %v900 = vadd.f32 %v899, %v646
  %v901 = vrot.slane %v900, 4
  %v902 = vadd.f32 %v900, %v901
  %v903 = vrot.slane %v902, 2
  %v904 = vadd.f32 %v902, %v903
  %v905 = vrot.slane %v904, 1
  %v906 = vadd.f32 %v904, %v905
  %v907 = vadd.f32 %v399, %v407
  %v908 = vadd.f32 %v907, %v415
  %v909 = vadd.f32 %v908, %v423
  %v910 = vadd.f32 %v909, %v431
  %v911 = vadd.f32 %v910, %v439
  %v912 = vadd.f32 %v911, %v447
  %v913 = vadd.f32 %v912, %v455
  %v914 = vadd.f32 %v913, %v463
  %v915 = vadd.f32 %v914, %v471
  %v916 = vadd.f32 %v915, %v479
  %v917 = vadd.f32 %v916, %v487
  %v918 = vadd.f32 %v917, %v495
  %v919 = vadd.f32 %v918, %v503
  %v920 = vadd.f32 %v919, %v511
  %v921 = vadd.f32 %v920, %v519
  %v922 = vadd.f32 %v921, %v527
  %v923 = vadd.f32 %v922, %v535
  %v924 = vadd.f32 %v923, %v543
  %v925 = vadd.f32 %v924, %v551
  %v926 = vadd.f32 %v925, %v559
  %v927 = vadd.f32 %v926, %v567
  %v928 = vadd.f32 %v927, %v575
  %v929 = vadd.f32 %v928, %v583
  %v930 = vadd.f32 %v929, %v591
  %v931 = vadd.f32 %v930, %v599
  %v932 = vadd.f32 %v931, %v607
  %v933 = vadd.f32 %v932, %v615
  %v934 = vadd.f32 %v933, %v623
  %v935 = vadd.f32 %v934, %v631
  %v936 = vadd.f32 %v935, %v639
  %v937 = vadd.f32 %v936, %v647
  %v938 = vrot.slane %v937, 4
  %v939 = vadd.f32 %v937, %v938
  %v940 = vrot.slane %v939, 2
  %v941 = vadd.f32 %v939, %v940
  %v942 = vrot.slane %v941, 1
  %v943 = vadd.f32 %v941, %v942
  %v944 = vmax.f32 %v684, 1e-24
  %v945 = vmax.f32 %v721, 1e-24
  %v946 = vmax.f32 %v758, 1e-24
  %v947 = vmax.f32 %v795, 1e-24
  %v948 = vmax.f32 %v832, 1e-24
  %v949 = vmax.f32 %v869, 1e-24
  %v950 = vmax.f32 %v906, 1e-24
  %v951 = vmax.f32 %v943, 1e-24
  %v952 = vrsqrt.pop %v944
  %v953 = vrsqrt.pop %v945
  %v954 = vrsqrt.pop %v946
  %v955 = vrsqrt.pop %v947
  %v956 = vrsqrt.pop %v948
  %v957 = vrsqrt.pop %v949
  %v958 = vrsqrt.pop %v950
  %v959 = vrsqrt.pop %v951
  %v968 = vcombine.low %v952, %v953
  %v969 = vcombine.low %v954, %v955
  %v970 = vcombine.low %v956, %v957
  %v971 = vcombine.low %v958, %v959
  %v973 = vunpack.c.l.s4 1966171168
  %v974 = vunpack.c.0.s8 %v973
  %v975 = vlaneseq
  %v976 = vshrl.u32 %v975, 7
  %v977 = vsub.s32 %v974, %v976
  %v978 = vrot.slane %v968, %v977
  %v980 = vunpack.c.l.s4 1966171168
  %v981 = vunpack.c.0.s8 %v980
  %v982 = vlaneseq
  %v983 = vshrl.u32 %v982, 7
  %v984 = vsub.s32 %v981, %v983
  %v985 = vrot.slane %v969, %v984
  %v987 = vunpack.c.l.s4 1966171168
  %v988 = vunpack.c.0.s8 %v987
  %v989 = vlaneseq
  %v990 = vshrl.u32 %v989, 7
  %v991 = vsub.s32 %v988, %v990
  %v992 = vrot.slane %v970, %v991
  %v994 = vunpack.c.l.s4 1966171168
  %v995 = vunpack.c.0.s8 %v994
  %v996 = vlaneseq
  %v997 = vshrl.u32 %v996, 7
  %v998 = vsub.s32 %v995, %v997
  %v999 = vrot.slane %v971, %v998
  %v1000 = vcombine.low %v978, %v985
  %v1001 = vcombine.low %v992, %v999
  %v1003 = vunpack.c.l.s4 1966171168
  %v1004 = vunpack.c.0.s8 %v1003
  %v1005 = vlaneseq
  %v1006 = vshrl.u32 %v1005, 7
  %v1007 = vsub.s32 %v1004, %v1006
  %v1008 = vrot.slane %v1000, %v1007
  %v1010 = vunpack.c.l.s4 1966171168
  %v1011 = vunpack.c.0.s8 %v1010
  %v1012 = vlaneseq
  %v1013 = vshrl.u32 %v1012, 7
  %v1014 = vsub.s32 %v1011, %v1013
  %v1015 = vrot.slane %v1001, %v1014
  %v1016 = vcombine.low %v1008, %v1015
  %1018 = vst [vmem:[%s1] sm:$0xff] %v1016
  // Predicated region
  $region6: #{npcface_forward.2} parent=0 // pred_check
    _
  $region7: #{npcface_forward.2} parent=0 // pred_check_branch
    %1020 = sbr.rel (0) target = $region9
  $region8: #{npcface_forward.2} parent=0 // pred_region
    _
  $region9: #{npcface_forward.2} parent=0 // pred_fallthru
    _
  // Predicated region
  $region10: #{npcface_forward.2} parent=0 // pred_check
    _
  $region11: #{npcface_forward.2} parent=0 // pred_check_branch
    %1022 = sbr.rel (0) target = $region13
  $region12: #{npcface_forward.2} parent=0 // pred_region
    _
  $region13: #{npcface_forward.2} parent=0 // pred_fallthru
    _

// kernel: npcface_forward.3
$region0: #{npcface_forward.3}
  #allocation0 [shape = 'u32[]', space=smem, size = 0x4, offset = 0x4, fixed_abs, tag = 'smem constant byte address 0x4 - core index']
  #allocation1 [shape = 'u32[144,128]{1,0:T(1,128)}', space=vmem, size = 0x12000, scoped, tag = 'internal scratch']
  %s0 = inlined_call_operand.vmem [shape: bf16[48,256], index: 0, kind: input, shape index: {}]
  %s1 = inlined_call_operand.vmem [shape: bf16[256,1024], index: 1, kind: input, shape index: {}]
  %s2 = inlined_call_operand.vmem [shape: f32[1,1024], index: 2, kind: input, shape index: {}]
  %s3 = inlined_call_operand.vmem [shape: f32[48,1], index: 3, kind: input, shape index: {}]
  %s4 = inlined_call_operand.vmem [shape: f32[48,1024], index: 4, kind: output, shape index: {0}]
  %s5 = inlined_call_operand.vmem [shape: f32[48,1], index: 5, kind: output, shape index: {1}]
  %s6 = inlined_call_operand.vmem [shape: f32[48,1], index: 6, kind: output, shape index: {2}]
  %7 = xla_tuple %s4, %s5, %s6
  %s8 = sld [smem:[#allocation0]]
  $region46: #{npcface_forward.3} parent=0
    _
  %s10 = ssub.s32 1, %s8
  %s11 = scalar_select 0, %s10, %s8
  // Predicated region
  $region2: #{npcface_forward.3} parent=0 // pred_check
    _
  $region3: #{npcface_forward.3} parent=0 // pred_check_branch
    %13 = sbr.rel (0) target = $region5
  $region4: #{npcface_forward.3} parent=0 // pred_region
    _
  $region5: #{npcface_forward.3} parent=0 // pred_fallthru
    _
  // Predicated region
  $region6: #{npcface_forward.3} parent=0 // pred_check
    _
  $region7: #{npcface_forward.3} parent=0 // pred_check_branch
    %15 = sbr.rel (0) target = $region9
  $region8: #{npcface_forward.3} parent=0 // pred_region
    _
  $region9: #{npcface_forward.3} parent=0 // pred_fallthru
    _
  // Predicated region
  $region10: #{npcface_forward.3} parent=0 // pred_check
    _
  $region11: #{npcface_forward.3} parent=0 // pred_check_branch
    %17 = sbr.rel (0) target = $region13
  $region12: #{npcface_forward.3} parent=0 // pred_region
    _
  $region13: #{npcface_forward.3} parent=0 // pred_fallthru
    _
  // Predicated region
  $region14: #{npcface_forward.3} parent=0 // pred_check
    _
  $region15: #{npcface_forward.3} parent=0 // pred_check_branch
    %19 = sbr.rel (0) target = $region17
  $region16: #{npcface_forward.3} parent=0 // pred_region
    _
  $region17: #{npcface_forward.3} parent=0 // pred_fallthru
    _
  %p20 = scmp.eq.s32.totalorder 0, 0
  // Predicated region
  $region18: #{npcface_forward.3} parent=0 // pred_check
    %p21 = pneg %p20
  $region19: #{npcface_forward.3} parent=0 // pred_check_branch
    %23 = sbr.rel (%p21) target = $region21
  $region20: #{npcface_forward.3} parent=0 // pred_region
    %vm24 = vcmask 7168
    %25 = vst.msk [vmem:[%s5] sm:$0xff] %vm24, 0.0
    %26 = vst.msk [vmem:[%s5 + $0x8] sm:$0xff] %vm24, 0.0
    %27 = vst.msk [vmem:[%s5 + $0x10] sm:$0xff] %vm24, 0.0
    %28 = vst.msk [vmem:[%s5 + $0x18] sm:$0xff] %vm24, 0.0
    %29 = vst.msk [vmem:[%s5 + $0x20] sm:$0xff] %vm24, 0.0
    %30 = vst.msk [vmem:[%s5 + $0x28] sm:$0xff] %vm24, 0.0
    %31 = vst.msk [vmem:[%s6] sm:$0xff] %vm24, 0.0
    %32 = vst.msk [vmem:[%s6 + $0x8] sm:$0xff] %vm24, 0.0
    %33 = vst.msk [vmem:[%s6 + $0x10] sm:$0xff] %vm24, 0.0
    %34 = vst.msk [vmem:[%s6 + $0x18] sm:$0xff] %vm24, 0.0
    %35 = vst.msk [vmem:[%s6 + $0x20] sm:$0xff] %vm24, 0.0
    %36 = vst.msk [vmem:[%s6 + $0x28] sm:$0xff] %vm24, 0.0
  $region21: #{npcface_forward.3} parent=0 // pred_fallthru
    _
  %v37 = vld [vmem:[%s0] sm:$0xff]
  %v38 = vld [vmem:[%s0 + $0x8] sm:$0xff]
  %v39 = vld [vmem:[%s0 + $0x10] sm:$0xff]
  %v40 = vld [vmem:[%s0 + $0x18] sm:$0xff]
  %v41 = vld [vmem:[%s0 + $0x20] sm:$0xff]
  %v42 = vld [vmem:[%s0 + $0x28] sm:$0xff]
  %v43 = vld [vmem:[%s1] sm:$0xff]
  %v44 = vld [vmem:[%s1 + $0x8] sm:$0xff]
  %v45 = vld [vmem:[%s1 + $0x10] sm:$0xff]
  %v46 = vld [vmem:[%s1 + $0x18] sm:$0xff]
  %v47 = vld [vmem:[%s1 + $0x20] sm:$0xff]
  %v48 = vld [vmem:[%s1 + $0x28] sm:$0xff]
  %v49 = vld [vmem:[%s1 + $0x30] sm:$0xff]
  %v50 = vld [vmem:[%s1 + $0x38] sm:$0xff]
  %v51 = vld [vmem:[%s1 + $0x40] sm:$0xff]
  %v52 = vld [vmem:[%s1 + $0x48] sm:$0xff]
  %v53 = vld [vmem:[%s1 + $0x50] sm:$0xff]
  %v54 = vld [vmem:[%s1 + $0x58] sm:$0xff]
  %v55 = vld [vmem:[%s1 + $0x60] sm:$0xff]
  %v56 = vld [vmem:[%s1 + $0x68] sm:$0xff]
  %v57 = vld [vmem:[%s1 + $0x70] sm:$0xff]
  %v58 = vld [vmem:[%s1 + $0x78] sm:$0xff]
  %v59 = vld [vmem:[%s1 + $0x80] sm:$0xff]
  %v60 = vld [vmem:[%s1 + $0x88] sm:$0xff]
  %v61 = vld [vmem:[%s1 + $0x90] sm:$0xff]
  %v62 = vld [vmem:[%s1 + $0x98] sm:$0xff]
  %v63 = vld [vmem:[%s1 + $0xa0] sm:$0xff]
  %v64 = vld [vmem:[%s1 + $0xa8] sm:$0xff]
  %v65 = vld [vmem:[%s1 + $0xb0] sm:$0xff]
  %v66 = vld [vmem:[%s1 + $0xb8] sm:$0xff]
  %v67 = vld [vmem:[%s1 + $0xc0] sm:$0xff]
  %v68 = vld [vmem:[%s1 + $0xc8] sm:$0xff]
  %v69 = vld [vmem:[%s1 + $0xd0] sm:$0xff]
  %v70 = vld [vmem:[%s1 + $0xd8] sm:$0xff]
  %v71 = vld [vmem:[%s1 + $0xe0] sm:$0xff]
  %v72 = vld [vmem:[%s1 + $0xe8] sm:$0xff]
  %v73 = vld [vmem:[%s1 + $0xf0] sm:$0xff]
  %v74 = vld [vmem:[%s1 + $0xf8] sm:$0xff]
  %v75 = vld [vmem:[%s1 + $0x100] sm:$0xff]
  %v76 = vld [vmem:[%s1 + $0x108] sm:$0xff]
  %v77 = vld [vmem:[%s1 + $0x110] sm:$0xff]
  %v78 = vld [vmem:[%s1 + $0x118] sm:$0xff]
  %v79 = vld [vmem:[%s1 + $0x120] sm:$0xff]
  %v80 = vld [vmem:[%s1 + $0x128] sm:$0xff]
  %v81 = vld [vmem:[%s1 + $0x130] sm:$0xff]
  %v82 = vld [vmem:[%s1 + $0x138] sm:$0xff]
  %v83 = vld [vmem:[%s1 + $0x140] sm:$0xff]
  %v84 = vld [vmem:[%s1 + $0x148] sm:$0xff]
  %v85 = vld [vmem:[%s1 + $0x150] sm:$0xff]
  %v86 = vld [vmem:[%s1 + $0x158] sm:$0xff]
  %v87 = vld [vmem:[%s1 + $0x160] sm:$0xff]
  %v88 = vld [vmem:[%s1 + $0x168] sm:$0xff]
  %v89 = vld [vmem:[%s1 + $0x170] sm:$0xff]
  %v90 = vld [vmem:[%s1 + $0x178] sm:$0xff]
  %v91 = vld [vmem:[%s1 + $0x180] sm:$0xff]
  %v92 = vld [vmem:[%s1 + $0x188] sm:$0xff]
  %v93 = vld [vmem:[%s1 + $0x190] sm:$0xff]
  %v94 = vld [vmem:[%s1 + $0x198] sm:$0xff]
  %v95 = vld [vmem:[%s1 + $0x1a0] sm:$0xff]
  %v96 = vld [vmem:[%s1 + $0x1a8] sm:$0xff]
  %v97 = vld [vmem:[%s1 + $0x1b0] sm:$0xff]
  %v98 = vld [vmem:[%s1 + $0x1b8] sm:$0xff]
  %v99 = vld [vmem:[%s1 + $0x1c0] sm:$0xff]
  %v100 = vld [vmem:[%s1 + $0x1c8] sm:$0xff]
  %v101 = vld [vmem:[%s1 + $0x1d0] sm:$0xff]
  %v102 = vld [vmem:[%s1 + $0x1d8] sm:$0xff]
  %v103 = vld [vmem:[%s1 + $0x1e0] sm:$0xff]
  %v104 = vld [vmem:[%s1 + $0x1e8] sm:$0xff]
  %v105 = vld [vmem:[%s1 + $0x1f0] sm:$0xff]
  %v106 = vld [vmem:[%s1 + $0x1f8] sm:$0xff]
  %v107 = vld [vmem:[%s1 + $0x200] sm:$0xff]
  %v108 = vld [vmem:[%s1 + $0x208] sm:$0xff]
  %v109 = vld [vmem:[%s1 + $0x210] sm:$0xff]
  %v110 = vld [vmem:[%s1 + $0x218] sm:$0xff]
  %v111 = vld [vmem:[%s1 + $0x220] sm:$0xff]
  %v112 = vld [vmem:[%s1 + $0x228] sm:$0xff]
  %v113 = vld [vmem:[%s1 + $0x230] sm:$0xff]
  %v114 = vld [vmem:[%s1 + $0x238] sm:$0xff]
  %v115 = vld [vmem:[%s1 + $0x240] sm:$0xff]
  %v116 = vld [vmem:[%s1 + $0x248] sm:$0xff]
  %v117 = vld [vmem:[%s1 + $0x250] sm:$0xff]
  %v118 = vld [vmem:[%s1 + $0x258] sm:$0xff]
  %v119 = vld [vmem:[%s1 + $0x260] sm:$0xff]
  %v120 = vld [vmem:[%s1 + $0x268] sm:$0xff]
  %v121 = vld [vmem:[%s1 + $0x270] sm:$0xff]
  %v122 = vld [vmem:[%s1 + $0x278] sm:$0xff]
  %v123 = vld [vmem:[%s1 + $0x280] sm:$0xff]
  %v124 = vld [vmem:[%s1 + $0x288] sm:$0xff]
  %v125 = vld [vmem:[%s1 + $0x290] sm:$0xff]
  %v126 = vld [vmem:[%s1 + $0x298] sm:$0xff]
  %v127 = vld [vmem:[%s1 + $0x2a0] sm:$0xff]
  %v128 = vld [vmem:[%s1 + $0x2a8] sm:$0xff]
  %v129 = vld [vmem:[%s1 + $0x2b0] sm:$0xff]
  %v130 = vld [vmem:[%s1 + $0x2b8] sm:$0xff]
  %v131 = vld [vmem:[%s1 + $0x2c0] sm:$0xff]
  %v132 = vld [vmem:[%s1 + $0x2c8] sm:$0xff]
  %v133 = vld [vmem:[%s1 + $0x2d0] sm:$0xff]
  %v134 = vld [vmem:[%s1 + $0x2d8] sm:$0xff]
  %v135 = vld [vmem:[%s1 + $0x2e0] sm:$0xff]
  %v136 = vld [vmem:[%s1 + $0x2e8] sm:$0xff]
  %v137 = vld [vmem:[%s1 + $0x2f0] sm:$0xff]
  %v138 = vld [vmem:[%s1 + $0x2f8] sm:$0xff]
  %v139 = vld [vmem:[%s1 + $0x300] sm:$0xff]
  %v140 = vld [vmem:[%s1 + $0x308] sm:$0xff]
  %v141 = vld [vmem:[%s1 + $0x310] sm:$0xff]
  %v142 = vld [vmem:[%s1 + $0x318] sm:$0xff]
  %v143 = vld [vmem:[%s1 + $0x320] sm:$0xff]
  %v144 = vld [vmem:[%s1 + $0x328] sm:$0xff]
  %v145 = vld [vmem:[%s1 + $0x330] sm:$0xff]
  %v146 = vld [vmem:[%s1 + $0x338] sm:$0xff]
  %v147 = vld [vmem:[%s1 + $0x340] sm:$0xff]
  %v148 = vld [vmem:[%s1 + $0x348] sm:$0xff]
  %v149 = vld [vmem:[%s1 + $0x350] sm:$0xff]
  %v150 = vld [vmem:[%s1 + $0x358] sm:$0xff]
  %v151 = vld [vmem:[%s1 + $0x360] sm:$0xff]
  %v152 = vld [vmem:[%s1 + $0x368] sm:$0xff]
  %v153 = vld [vmem:[%s1 + $0x370] sm:$0xff]
  %v154 = vld [vmem:[%s1 + $0x378] sm:$0xff]
  %v155 = vld [vmem:[%s1 + $0x380] sm:$0xff]
  %v156 = vld [vmem:[%s1 + $0x388] sm:$0xff]
  %v157 = vld [vmem:[%s1 + $0x390] sm:$0xff]
  %v158 = vld [vmem:[%s1 + $0x398] sm:$0xff]
  %v159 = vld [vmem:[%s1 + $0x3a0] sm:$0xff]
  %v160 = vld [vmem:[%s1 + $0x3a8] sm:$0xff]
  %v161 = vld [vmem:[%s1 + $0x3b0] sm:$0xff]
  %v162 = vld [vmem:[%s1 + $0x3b8] sm:$0xff]
  %v163 = vld [vmem:[%s1 + $0x3c0] sm:$0xff]
  %v164 = vld [vmem:[%s1 + $0x3c8] sm:$0xff]
  %v165 = vld [vmem:[%s1 + $0x3d0] sm:$0xff]
  %v166 = vld [vmem:[%s1 + $0x3d8] sm:$0xff]
  %v167 = vld [vmem:[%s1 + $0x3e0] sm:$0xff]
  %v168 = vld [vmem:[%s1 + $0x3e8] sm:$0xff]
  %v169 = vld [vmem:[%s1 + $0x3f0] sm:$0xff]
  %v170 = vld [vmem:[%s1 + $0x3f8] sm:$0xff]
  %v177 = vunpack.c.l.b16 %v37
  %v178 = vunpack.c.h.b16 %v37
  %v179 = vunpack.c.l.b16 %v38
  %v180 = vunpack.c.h.b16 %v38
  %v181 = vunpack.c.l.b16 %v39
  %v182 = vunpack.c.h.b16 %v39
  %v183 = vunpack.c.l.b16 %v40
  %v184 = vunpack.c.h.b16 %v40
  %v185 = vunpack.c.l.b16 %v41
  %v186 = vunpack.c.h.b16 %v41
  %v187 = vunpack.c.l.b16 %v42
  %v188 = vunpack.c.h.b16 %v42
  %v189 = vpack.c.b16 %v179, %v177
  %v190 = vpack.c.b16 %v180, %v178
  %v191 = vpack.c.b16 %v183, %v181
  %v192 = vpack.c.b16 %v184, %v182
  %v193 = vpack.c.b16 %v187, %v185
  %v194 = vpack.c.b16 %v188, %v186
  %v329 = vunpack.c.l.b16 %v43
  %v330 = vunpack.c.h.b16 %v43
  %v331 = vunpack.c.l.b16 %v44
  %v332 = vunpack.c.h.b16 %v44
  %v333 = vunpack.c.l.b16 %v45
  %v334 = vunpack.c.h.b16 %v45
  %v335 = vunpack.c.l.b16 %v46
  %v336 = vunpack.c.h.b16 %v46
  %v337 = vunpack.c.l.b16 %v47
  %v338 = vunpack.c.h.b16 %v47
  %v339 = vunpack.c.l.b16 %v48
  %v340 = vunpack.c.h.b16 %v48
  %v341 = vunpack.c.l.b16 %v49
  %v342 = vunpack.c.h.b16 %v49
  %v343 = vunpack.c.l.b16 %v50
  %v344 = vunpack.c.h.b16 %v50
  %v345 = vunpack.c.l.b16 %v51
  %v346 = vunpack.c.h.b16 %v51
  %v347 = vunpack.c.l.b16 %v52
  %v348 = vunpack.c.h.b16 %v52
  %v349 = vunpack.c.l.b16 %v53
  %v350 = vunpack.c.h.b16 %v53
  %v351 = vunpack.c.l.b16 %v54
  %v352 = vunpack.c.h.b16 %v54
  %v353 = vunpack.c.l.b16 %v55
  %v354 = vunpack.c.h.b16 %v55
  %v355 = vunpack.c.l.b16 %v56
  %v356 = vunpack.c.h.b16 %v56
  %v357 = vunpack.c.l.b16 %v57
  %v358 = vunpack.c.h.b16 %v57
  %v359 = vunpack.c.l.b16 %v58
  %v360 = vunpack.c.h.b16 %v58
  %v361 = vunpack.c.l.b16 %v59
  %v362 = vunpack.c.h.b16 %v59
  %v363 = vunpack.c.l.b16 %v60
  %v364 = vunpack.c.h.b16 %v60
  %v365 = vunpack.c.l.b16 %v61
  %v366 = vunpack.c.h.b16 %v61
  %v367 = vunpack.c.l.b16 %v62
  %v368 = vunpack.c.h.b16 %v62
  %v369 = vunpack.c.l.b16 %v63
  %v370 = vunpack.c.h.b16 %v63
  %v371 = vunpack.c.l.b16 %v64
  %v372 = vunpack.c.h.b16 %v64
  %v373 = vunpack.c.l.b16 %v65
  %v374 = vunpack.c.h.b16 %v65
  %v375 = vunpack.c.l.b16 %v66
  %v376 = vunpack.c.h.b16 %v66
  %v377 = vunpack.c.l.b16 %v67
  %v378 = vunpack.c.h.b16 %v67
  %v379 = vunpack.c.l.b16 %v68
  %v380 = vunpack.c.h.b16 %v68
  %v381 = vunpack.c.l.b16 %v69
  %v382 = vunpack.c.h.b16 %v69
  %v383 = vunpack.c.l.b16 %v70
  %v384 = vunpack.c.h.b16 %v70
  %v385 = vunpack.c.l.b16 %v71
  %v386 = vunpack.c.h.b16 %v71
  %v387 = vunpack.c.l.b16 %v72
  %v388 = vunpack.c.h.b16 %v72
  %v389 = vunpack.c.l.b16 %v73
  %v390 = vunpack.c.h.b16 %v73
  %v391 = vunpack.c.l.b16 %v74
  %v392 = vunpack.c.h.b16 %v74
  %v393 = vunpack.c.l.b16 %v75
  %v394 = vunpack.c.h.b16 %v75
  %v395 = vunpack.c.l.b16 %v76
  %v396 = vunpack.c.h.b16 %v76
  %v397 = vunpack.c.l.b16 %v77
  %v398 = vunpack.c.h.b16 %v77
  %v399 = vunpack.c.l.b16 %v78
  %v400 = vunpack.c.h.b16 %v78
  %v401 = vunpack.c.l.b16 %v79
  %v402 = vunpack.c.h.b16 %v79
  %v403 = vunpack.c.l.b16 %v80
  %v404 = vunpack.c.h.b16 %v80
  %v405 = vunpack.c.l.b16 %v81
  %v406 = vunpack.c.h.b16 %v81
  %v407 = vunpack.c.l.b16 %v82
  %v408 = vunpack.c.h.b16 %v82
  %v409 = vunpack.c.l.b16 %v83
  %v410 = vunpack.c.h.b16 %v83
  %v411 = vunpack.c.l.b16 %v84
  %v412 = vunpack.c.h.b16 %v84
  %v413 = vunpack.c.l.b16 %v85
  %v414 = vunpack.c.h.b16 %v85
  %v415 = vunpack.c.l.b16 %v86
  %v416 = vunpack.c.h.b16 %v86
  %v417 = vunpack.c.l.b16 %v87
  %v418 = vunpack.c.h.b16 %v87
  %v419 = vunpack.c.l.b16 %v88
  %v420 = vunpack.c.h.b16 %v88
  %v421 = vunpack.c.l.b16 %v89
  %v422 = vunpack.c.h.b16 %v89
  %v423 = vunpack.c.l.b16 %v90
  %v424 = vunpack.c.h.b16 %v90
  %v425 = vunpack.c.l.b16 %v91
  %v426 = vunpack.c.h.b16 %v91
  %v427 = vunpack.c.l.b16 %v92
  %v428 = vunpack.c.h.b16 %v92
  %v429 = vunpack.c.l.b16 %v93
  %v430 = vunpack.c.h.b16 %v93
  %v431 = vunpack.c.l.b16 %v94
  %v432 = vunpack.c.h.b16 %v94
  %v433 = vunpack.c.l.b16 %v95
  %v434 = vunpack.c.h.b16 %v95
  %v435 = vunpack.c.l.b16 %v96
  %v436 = vunpack.c.h.b16 %v96
  %v437 = vunpack.c.l.b16 %v97
  %v438 = vunpack.c.h.b16 %v97
  %v439 = vunpack.c.l.b16 %v98
  %v440 = vunpack.c.h.b16 %v98
  %v441 = vunpack.c.l.b16 %v99
  %v442 = vunpack.c.h.b16 %v99
  %v443 = vunpack.c.l.b16 %v100
  %v444 = vunpack.c.h.b16 %v100
  %v445 = vunpack.c.l.b16 %v101
  %v446 = vunpack.c.h.b16 %v101
  %v447 = vunpack.c.l.b16 %v102
  %v448 = vunpack.c.h.b16 %v102
  %v449 = vunpack.c.l.b16 %v103
  %v450 = vunpack.c.h.b16 %v103
  %v451 = vunpack.c.l.b16 %v104
  %v452 = vunpack.c.h.b16 %v104
  %v453 = vunpack.c.l.b16 %v105
  %v454 = vunpack.c.h.b16 %v105
  %v455 = vunpack.c.l.b16 %v106
  %v456 = vunpack.c.h.b16 %v106
  %v457 = vunpack.c.l.b16 %v107
  %v458 = vunpack.c.h.b16 %v107
  %v459 = vunpack.c.l.b16 %v108
  %v460 = vunpack.c.h.b16 %v108
  %v461 = vunpack.c.l.b16 %v109
  %v462 = vunpack.c.h.b16 %v109
  %v463 = vunpack.c.l.b16 %v110
  %v464 = vunpack.c.h.b16 %v110
  %v465 = vunpack.c.l.b16 %v111
  %v466 = vunpack.c.h.b16 %v111
  %v467 = vunpack.c.l.b16 %v112
  %v468 = vunpack.c.h.b16 %v112
  %v469 = vunpack.c.l.b16 %v113
  %v470 = vunpack.c.h.b16 %v113
  %v471 = vunpack.c.l.b16 %v114
  %v472 = vunpack.c.h.b16 %v114
  %v473 = vunpack.c.l.b16 %v115
  %v474 = vunpack.c.h.b16 %v115
  %v475 = vunpack.c.l.b16 %v116
  %v476 = vunpack.c.h.b16 %v116
  %v477 = vunpack.c.l.b16 %v117
  %v478 = vunpack.c.h.b16 %v117
  %v479 = vunpack.c.l.b16 %v118
  %v480 = vunpack.c.h.b16 %v118
  %v481 = vunpack.c.l.b16 %v119
  %v482 = vunpack.c.h.b16 %v119
  %v483 = vunpack.c.l.b16 %v120
  %v484 = vunpack.c.h.b16 %v120
  %v485 = vunpack.c.l.b16 %v121
  %v486 = vunpack.c.h.b16 %v121
  %v487 = vunpack.c.l.b16 %v122
  %v488 = vunpack.c.h.b16 %v122
  %v489 = vunpack.c.l.b16 %v123
  %v490 = vunpack.c.h.b16 %v123
  %v491 = vunpack.c.l.b16 %v124
  %v492 = vunpack.c.h.b16 %v124
  %v493 = vunpack.c.l.b16 %v125
  %v494 = vunpack.c.h.b16 %v125
  %v495 = vunpack.c.l.b16 %v126
  %v496 = vunpack.c.h.b16 %v126
  %v497 = vunpack.c.l.b16 %v127
  %v498 = vunpack.c.h.b16 %v127
  %v499 = vunpack.c.l.b16 %v128
  %v500 = vunpack.c.h.b16 %v128
  %v501 = vunpack.c.l.b16 %v129
  %v502 = vunpack.c.h.b16 %v129
  %v503 = vunpack.c.l.b16 %v130
  %v504 = vunpack.c.h.b16 %v130
  %v505 = vunpack.c.l.b16 %v131
  %v506 = vunpack.c.h.b16 %v131
  %v507 = vunpack.c.l.b16 %v132
  %v508 = vunpack.c.h.b16 %v132
  %v509 = vunpack.c.l.b16 %v133
  %v510 = vunpack.c.h.b16 %v133
  %v511 = vunpack.c.l.b16 %v134
  %v512 = vunpack.c.h.b16 %v134
  %v513 = vunpack.c.l.b16 %v135
  %v514 = vunpack.c.h.b16 %v135
  %v515 = vunpack.c.l.b16 %v136
  %v516 = vunpack.c.h.b16 %v136
  %v517 = vunpack.c.l.b16 %v137
  %v518 = vunpack.c.h.b16 %v137
  %v519 = vunpack.c.l.b16 %v138
  %v520 = vunpack.c.h.b16 %v138
  %v521 = vunpack.c.l.b16 %v139
  %v522 = vunpack.c.h.b16 %v139
  %v523 = vunpack.c.l.b16 %v140
  %v524 = vunpack.c.h.b16 %v140
  %v525 = vunpack.c.l.b16 %v141
  %v526 = vunpack.c.h.b16 %v141
  %v527 = vunpack.c.l.b16 %v142
  %v528 = vunpack.c.h.b16 %v142
  %v529 = vunpack.c.l.b16 %v143
  %v530 = vunpack.c.h.b16 %v143
  %v531 = vunpack.c.l.b16 %v144
  %v532 = vunpack.c.h.b16 %v144
  %v533 = vunpack.c.l.b16 %v145
  %v534 = vunpack.c.h.b16 %v145
  %v535 = vunpack.c.l.b16 %v146
  %v536 = vunpack.c.h.b16 %v146
  %v537 = vunpack.c.l.b16 %v147
  %v538 = vunpack.c.h.b16 %v147
  %v539 = vunpack.c.l.b16 %v148
  %v540 = vunpack.c.h.b16 %v148
  %v541 = vunpack.c.l.b16 %v149
  %v542 = vunpack.c.h.b16 %v149
  %v543 = vunpack.c.l.b16 %v150
  %v544 = vunpack.c.h.b16 %v150
  %v545 = vunpack.c.l.b16 %v151
  %v546 = vunpack.c.h.b16 %v151
  %v547 = vunpack.c.l.b16 %v152
  %v548 = vunpack.c.h.b16 %v152
  %v549 = vunpack.c.l.b16 %v153
  %v550 = vunpack.c.h.b16 %v153
  %v551 = vunpack.c.l.b16 %v154
  %v552 = vunpack.c.h.b16 %v154
  %v553 = vunpack.c.l.b16 %v155
  %v554 = vunpack.c.h.b16 %v155
  %v555 = vunpack.c.l.b16 %v156
  %v556 = vunpack.c.h.b16 %v156
  %v557 = vunpack.c.l.b16 %v157
  %v558 = vunpack.c.h.b16 %v157
  %v559 = vunpack.c.l.b16 %v158
  %v560 = vunpack.c.h.b16 %v158
  %v561 = vunpack.c.l.b16 %v159
  %v562 = vunpack.c.h.b16 %v159
  %v563 = vunpack.c.l.b16 %v160
  %v564 = vunpack.c.h.b16 %v160
  %v565 = vunpack.c.l.b16 %v161
  %v566 = vunpack.c.h.b16 %v161
  %v567 = vunpack.c.l.b16 %v162
  %v568 = vunpack.c.h.b16 %v162
  %v569 = vunpack.c.l.b16 %v163
  %v570 = vunpack.c.h.b16 %v163
  %v571 = vunpack.c.l.b16 %v164
  %v572 = vunpack.c.h.b16 %v164
  %v573 = vunpack.c.l.b16 %v165
  %v574 = vunpack.c.h.b16 %v165
  %v575 = vunpack.c.l.b16 %v166
  %v576 = vunpack.c.h.b16 %v166
  %v577 = vunpack.c.l.b16 %v167
  %v578 = vunpack.c.h.b16 %v167
  %v579 = vunpack.c.l.b16 %v168
  %v580 = vunpack.c.h.b16 %v168
  %v581 = vunpack.c.l.b16 %v169
  %v582 = vunpack.c.h.b16 %v169
  %v583 = vunpack.c.l.b16 %v170
  %v584 = vunpack.c.h.b16 %v170
  %v585 = vpack.c.b16 %v337, %v329
  %v586 = vpack.c.b16 %v338, %v330
  %v587 = vpack.c.b16 %v339, %v331
  %v588 = vpack.c.b16 %v340, %v332
  %v589 = vpack.c.b16 %v341, %v333
  %v590 = vpack.c.b16 %v342, %v334
  %v591 = vpack.c.b16 %v343, %v335
  %v592 = vpack.c.b16 %v344, %v336
  %v593 = vpack.c.b16 %v353, %v345
  %v594 = vpack.c.b16 %v354, %v346
  %v595 = vpack.c.b16 %v355, %v347
  %v596 = vpack.c.b16 %v356, %v348
  %v597 = vpack.c.b16 %v357, %v349
  %v598 = vpack.c.b16 %v358, %v350
  %v599 = vpack.c.b16 %v359, %v351
  %v600 = vpack.c.b16 %v360, %v352
  %v601 = vpack.c.b16 %v369, %v361
  %v602 = vpack.c.b16 %v370, %v362
  %v603 = vpack.c.b16 %v371, %v363
  %v604 = vpack.c.b16 %v372, %v364
  %v605 = vpack.c.b16 %v373, %v365
  %v606 = vpack.c.b16 %v374, %v366
  %v607 = vpack.c.b16 %v375, %v367
  %v608 = vpack.c.b16 %v376, %v368
  %v609 = vpack.c.b16 %v385, %v377
  %v610 = vpack.c.b16 %v386, %v378
  %v611 = vpack.c.b16 %v387, %v379
  %v612 = vpack.c.b16 %v388, %v380
  %v613 = vpack.c.b16 %v389, %v381
  %v614 = vpack.c.b16 %v390, %v382
  %v615 = vpack.c.b16 %v391, %v383
  %v616 = vpack.c.b16 %v392, %v384
  %v617 = vpack.c.b16 %v401, %v393
  %v618 = vpack.c.b16 %v402, %v394
  %v619 = vpack.c.b16 %v403, %v395
  %v620 = vpack.c.b16 %v404, %v396
  %v621 = vpack.c.b16 %v405, %v397
  %v622 = vpack.c.b16 %v406, %v398
  %v623 = vpack.c.b16 %v407, %v399
  %v624 = vpack.c.b16 %v408, %v400
  %v625 = vpack.c.b16 %v417, %v409
  %v626 = vpack.c.b16 %v418, %v410
  %v627 = vpack.c.b16 %v419, %v411
  %v628 = vpack.c.b16 %v420, %v412
  %v629 = vpack.c.b16 %v421, %v413
  %v630 = vpack.c.b16 %v422, %v414
  %v631 = vpack.c.b16 %v423, %v415
  %v632 = vpack.c.b16 %v424, %v416
  %v633 = vpack.c.b16 %v433, %v425
  %v634 = vpack.c.b16 %v434, %v426
  %v635 = vpack.c.b16 %v435, %v427
  %v636 = vpack.c.b16 %v436, %v428
  %v637 = vpack.c.b16 %v437, %v429
  %v638 = vpack.c.b16 %v438, %v430
  %v639 = vpack.c.b16 %v439, %v431
  %v640 = vpack.c.b16 %v440, %v432
  %v641 = vpack.c.b16 %v449, %v441
  %v642 = vpack.c.b16 %v450, %v442
  %v643 = vpack.c.b16 %v451, %v443
  %v644 = vpack.c.b16 %v452, %v444
  %v645 = vpack.c.b16 %v453, %v445
  %v646 = vpack.c.b16 %v454, %v446
  %v647 = vpack.c.b16 %v455, %v447
  %v648 = vpack.c.b16 %v456, %v448
  %v649 = vpack.c.b16 %v465, %v457
  %v650 = vpack.c.b16 %v466, %v458
  %v651 = vpack.c.b16 %v467, %v459
  %v652 = vpack.c.b16 %v468, %v460
  %v653 = vpack.c.b16 %v469, %v461
  %v654 = vpack.c.b16 %v470, %v462
  %v655 = vpack.c.b16 %v471, %v463
  %v656 = vpack.c.b16 %v472, %v464
  %v657 = vpack.c.b16 %v481, %v473
  %v658 = vpack.c.b16 %v482, %v474
  %v659 = vpack.c.b16 %v483, %v475
  %v660 = vpack.c.b16 %v484, %v476
  %v661 = vpack.c.b16 %v485, %v477
  %v662 = vpack.c.b16 %v486, %v478
  %v663 = vpack.c.b16 %v487, %v479
  %v664 = vpack.c.b16 %v488, %v480
  %v665 = vpack.c.b16 %v497, %v489
  %v666 = vpack.c.b16 %v498, %v490
  %v667 = vpack.c.b16 %v499, %v491
  %v668 = vpack.c.b16 %v500, %v492
  %v669 = vpack.c.b16 %v501, %v493
  %v670 = vpack.c.b16 %v502, %v494
  %v671 = vpack.c.b16 %v503, %v495
  %v672 = vpack.c.b16 %v504, %v496
  %v673 = vpack.c.b16 %v513, %v505
  %v674 = vpack.c.b16 %v514, %v506
  %v675 = vpack.c.b16 %v515, %v507
  %v676 = vpack.c.b16 %v516, %v508
  %v677 = vpack.c.b16 %v517, %v509
  %v678 = vpack.c.b16 %v518, %v510
  %v679 = vpack.c.b16 %v519, %v511
  %v680 = vpack.c.b16 %v520, %v512
  %v681 = vpack.c.b16 %v529, %v521
  %v682 = vpack.c.b16 %v530, %v522
  %v683 = vpack.c.b16 %v531, %v523
  %v684 = vpack.c.b16 %v532, %v524
  %v685 = vpack.c.b16 %v533, %v525
  %v686 = vpack.c.b16 %v534, %v526
  %v687 = vpack.c.b16 %v535, %v527
  %v688 = vpack.c.b16 %v536, %v528
  %v689 = vpack.c.b16 %v545, %v537
  %v690 = vpack.c.b16 %v546, %v538
  %v691 = vpack.c.b16 %v547, %v539
  %v692 = vpack.c.b16 %v548, %v540
  %v693 = vpack.c.b16 %v549, %v541
  %v694 = vpack.c.b16 %v550, %v542
  %v695 = vpack.c.b16 %v551, %v543
  %v696 = vpack.c.b16 %v552, %v544
  %v697 = vpack.c.b16 %v561, %v553
  %v698 = vpack.c.b16 %v562, %v554
  %v699 = vpack.c.b16 %v563, %v555
  %v700 = vpack.c.b16 %v564, %v556
  %v701 = vpack.c.b16 %v565, %v557
  %v702 = vpack.c.b16 %v566, %v558
  %v703 = vpack.c.b16 %v567, %v559
  %v704 = vpack.c.b16 %v568, %v560
  %v705 = vpack.c.b16 %v577, %v569
  %v706 = vpack.c.b16 %v578, %v570
  %v707 = vpack.c.b16 %v579, %v571
  %v708 = vpack.c.b16 %v580, %v572
  %v709 = vpack.c.b16 %v581, %v573
  %v710 = vpack.c.b16 %v582, %v574
  %v711 = vpack.c.b16 %v583, %v575
  %v712 = vpack.c.b16 %v584, %v576
  %841 = vmatprep.subr.bf16.mxu0 %v586
  %842 = vmatpush1.bf16.msra.mxu0 %v585
  %843 = vmatprep.subr.bf16.mxu0 %v594
  %844 = vmatpush1.bf16.msra.mxu0 %v593
  %845 = vmatprep.subr.bf16.mxu0 %v602
  %846 = vmatpush1.bf16.msra.mxu0 %v601
  %847 = vmatprep.subr.bf16.mxu0 %v610
  %848 = vmatpush1.bf16.msra.mxu0 %v609
  %849 = vmatprep.subr.bf16.mxu0 %v618
  %850 = vmatpush1.bf16.msra.mxu0 %v617
  %851 = vmatprep.subr.bf16.mxu0 %v626
  %852 = vmatpush1.bf16.msra.mxu0 %v625
  %853 = vmatprep.subr.bf16.mxu0 %v634
  %854 = vmatpush1.bf16.msra.mxu0 %v633
  %855 = vmatprep.subr.bf16.mxu0 %v642
  %856 = vmatpush1.bf16.msra.mxu0 %v641
  %857 = vmatprep.subr.bf16.mxu0 %v650
  %858 = vmatpush1.bf16.msra.mxu0 %v649
  %859 = vmatprep.subr.bf16.mxu0 %v658
  %860 = vmatpush1.bf16.msra.mxu0 %v657
  %861 = vmatprep.subr.bf16.mxu0 %v666
  %862 = vmatpush1.bf16.msra.mxu0 %v665
  %863 = vmatprep.subr.bf16.mxu0 %v674
  %864 = vmatpush1.bf16.msra.mxu0 %v673
  %865 = vmatprep.subr.bf16.mxu0 %v682
  %866 = vmatpush1.bf16.msra.mxu0 %v681
  %867 = vmatprep.subr.bf16.mxu0 %v690
  %868 = vmatpush1.bf16.msra.mxu0 %v689
  %869 = vmatprep.subr.bf16.mxu0 %v698
  %870 = vmatpush1.bf16.msra.mxu0 %v697
  %871 = vmatprep.subr.bf16.mxu0 %v706
  %872 = vmatpush1.bf16.msra.mxu0 %v705
  %873 = vmatprep.mubr.bf16.mxu0 %v190
  %874 = vmatmul.mubr.bf16.gmra.mrb[0].mxu0 %v189
  %v875 = vpop.f32.mrb[0].mxu0
  %v876 = vadd.f32 0.0, %v875
  %v877 = vpop.f32.mrb[0].mxu0
  %v878 = vadd.f32 0.0, %v877
  %v879 = vpop.f32.mrb[0].mxu0
  %v880 = vadd.f32 0.0, %v879
  %v881 = vpop.f32.mrb[0].mxu0
  %v882 = vadd.f32 0.0, %v881
  %883 = vmatprep.mubr.bf16.mxu0 %v192
  %884 = vmatmul.mubr.bf16.gmra.mrb[0].mxu0 %v191
  %v885 = vpop.f32.mrb[0].mxu0
  %v886 = vadd.f32 0.0, %v885
  %v887 = vpop.f32.mrb[0].mxu0
  %v888 = vadd.f32 0.0, %v887
  %v889 = vpop.f32.mrb[0].mxu0
  %v890 = vadd.f32 0.0, %v889
  %v891 = vpop.f32.mrb[0].mxu0
  %v892 = vadd.f32 0.0, %v891
  %893 = vmatprep.mubr.bf16.mxu0 %v194
  %894 = vmatmul.mubr.bf16.gmra.mrb[0].mxu0 %v193
  %v895 = vpop.f32.mrb[0].mxu0
  %v896 = vadd.f32 0.0, %v895
  %v897 = vpop.f32.mrb[0].mxu0
  %v898 = vadd.f32 0.0, %v897
  %v899 = vpop.f32.mrb[0].mxu0
  %v900 = vadd.f32 0.0, %v899
  %v901 = vpop.f32.mrb[0].mxu0
  %v902 = vadd.f32 0.0, %v901
  %903 = vdwg.mxu0
  %904 = vmatprep.subr.bf16.mxu0 %v588
  %905 = vmatpush1.bf16.msra.mxu0 %v587
  %906 = vmatprep.subr.bf16.mxu0 %v596
  %907 = vmatpush1.bf16.msra.mxu0 %v595
  %908 = vmatprep.subr.bf16.mxu0 %v604
  %909 = vmatpush1.bf16.msra.mxu0 %v603
  %910 = vmatprep.subr.bf16.mxu0 %v612
  %911 = vmatpush1.bf16.msra.mxu0 %v611
  %912 = vmatprep.subr.bf16.mxu0 %v620
  %913 = vmatpush1.bf16.msra.mxu0 %v619
  %914 = vmatprep.subr.bf16.mxu0 %v628
  %915 = vmatpush1.bf16.msra.mxu0 %v627
  %916 = vmatprep.subr.bf16.mxu0 %v636
  %917 = vmatpush1.bf16.msra.mxu0 %v635
  %918 = vmatprep.subr.bf16.mxu0 %v644
  %919 = vmatpush1.bf16.msra.mxu0 %v643
  %920 = vmatprep.subr.bf16.mxu0 %v652
  %921 = vmatpush1.bf16.msra.mxu0 %v651
  %922 = vmatprep.subr.bf16.mxu0 %v660
  %923 = vmatpush1.bf16.msra.mxu0 %v659
  %924 = vmatprep.subr.bf16.mxu0 %v668
  %925 = vmatpush1.bf16.msra.mxu0 %v667
  %926 = vmatprep.subr.bf16.mxu0 %v676
  %927 = vmatpush1.bf16.msra.mxu0 %v675
  %928 = vmatprep.subr.bf16.mxu0 %v684
  %929 = vmatpush1.bf16.msra.mxu0 %v683
  %930 = vmatprep.subr.bf16.mxu0 %v692
  %931 = vmatpush1.bf16.msra.mxu0 %v691
  %932 = vmatprep.subr.bf16.mxu0 %v700
  %933 = vmatpush1.bf16.msra.mxu0 %v699
  %934 = vmatprep.subr.bf16.mxu0 %v708
  %935 = vmatpush1.bf16.msra.mxu0 %v707
  %936 = vmatprep.mubr.bf16.mxu0 %v190
  %937 = vmatmul.mubr.bf16.gmra.mrb[0].mxu0 %v189
  %v938 = vpop.f32.mrb[0].mxu0
  %v939 = vadd.f32 0.0, %v938
  %v940 = vpop.f32.mrb[0].mxu0
  %v941 = vadd.f32 0.0, %v940
  %v942 = vpop.f32.mrb[0].mxu0
  %v943 = vadd.f32 0.0, %v942
  %v944 = vpop.f32.mrb[0].mxu0
  %v945 = vadd.f32 0.0, %v944
  %946 = vmatprep.mubr.bf16.mxu0 %v192
  %947 = vmatmul.mubr.bf16.gmra.mrb[0].mxu0 %v191
  %v948 = vpop.f32.mrb[0].mxu0
  %v949 = vadd.f32 0.0, %v948
  %v950 = vpop.f32.mrb[0].mxu0
  %v951 = vadd.f32 0.0, %v950
  %v952 = vpop.f32.mrb[0].mxu0
  %v953 = vadd.f32 0.0, %v952
  %v954 = vpop.f32.mrb[0].mxu0
  %v955 = vadd.f32 0.0, %v954
  %956 = vmatprep.mubr.bf16.mxu0 %v194
  %957 = vmatmul.mubr.bf16.gmra.mrb[0].mxu0 %v193
  %v958 = vpop.f32.mrb[0].mxu0
  %v959 = vadd.f32 0.0, %v958
  %v960 = vpop.f32.mrb[0].mxu0
  %v961 = vadd.f32 0.0, %v960
  %v962 = vpop.f32.mrb[0].mxu0
  %v963 = vadd.f32 0.0, %v962
  %v964 = vpop.f32.mrb[0].mxu0
  %v965 = vadd.f32 0.0, %v964
  %966 = vdwg.mxu0
  %967 = vmatprep.subr.bf16.mxu0 %v590
  %968 = vmatpush1.bf16.msra.mxu0 %v589
  %969 = vmatprep.subr.bf16.mxu0 %v598
  %970 = vmatpush1.bf16.msra.mxu0 %v597
  %971 = vmatprep.subr.bf16.mxu0 %v606
  %972 = vmatpush1.bf16.msra.mxu0 %v605
  %973 = vmatprep.subr.bf16.mxu0 %v614
  %974 = vmatpush1.bf16.msra.mxu0 %v613
  %975 = vmatprep.subr.bf16.mxu0 %v622
  %976 = vmatpush1.bf16.msra.mxu0 %v621
  %977 = vmatprep.subr.bf16.mxu0 %v630
  %978 = vmatpush1.bf16.msra.mxu0 %v629
  %979 = vmatprep.subr.bf16.mxu0 %v638
  %980 = vmatpush1.bf16.msra.mxu0 %v637
  %981 = vmatprep.subr.bf16.mxu0 %v646
  %982 = vmatpush1.bf16.msra.mxu0 %v645
  %983 = vmatprep.subr.bf16.mxu0 %v654
  %984 = vmatpush1.bf16.msra.mxu0 %v653
  %985 = vmatprep.subr.bf16.mxu0 %v662
  %986 = vmatpush1.bf16.msra.mxu0 %v661
  %987 = vmatprep.subr.bf16.mxu0 %v670
  %988 = vmatpush1.bf16.msra.mxu0 %v669
  %989 = vmatprep.subr.bf16.mxu0 %v678
  %990 = vmatpush1.bf16.msra.mxu0 %v677
  %991 = vmatprep.subr.bf16.mxu0 %v686
  %992 = vmatpush1.bf16.msra.mxu0 %v685
  %993 = vmatprep.subr.bf16.mxu0 %v694
  %994 = vmatpush1.bf16.msra.mxu0 %v693
  %995 = vmatprep.subr.bf16.mxu0 %v702
  %996 = vmatpush1.bf16.msra.mxu0 %v701
  %997 = vmatprep.subr.bf16.mxu0 %v710
  %998 = vmatpush1.bf16.msra.mxu0 %v709
  %999 = vmatprep.mubr.bf16.mxu0 %v190
  %1000 = vmatmul.mubr.bf16.gmra.mrb[0].mxu0 %v189
  %v1001 = vpop.f32.mrb[0].mxu0
  %v1002 = vadd.f32 0.0, %v1001
  %v1003 = vpop.f32.mrb[0].mxu0
  %v1004 = vadd.f32 0.0, %v1003
  %v1005 = vpop.f32.mrb[0].mxu0
  %v1006 = vadd.f32 0.0, %v1005
  %v1007 = vpop.f32.mrb[0].mxu0
  %v1008 = vadd.f32 0.0, %v1007
  %1009 = vmatprep.mubr.bf16.mxu0 %v192
  %1010 = vmatmul.mubr.bf16.gmra.mrb[0].mxu0 %v191
  %v1011 = vpop.f32.mrb[0].mxu0
  %v1012 = vadd.f32 0.0, %v1011
  %v1013 = vpop.f32.mrb[0].mxu0
  %v1014 = vadd.f32 0.0, %v1013
  %v1015 = vpop.f32.mrb[0].mxu0
  %v1016 = vadd.f32 0.0, %v1015
  %v1017 = vpop.f32.mrb[0].mxu0
  %v1018 = vadd.f32 0.0, %v1017
  %1019 = vmatprep.mubr.bf16.mxu0 %v194
  %1020 = vmatmul.mubr.bf16.gmra.mrb[0].mxu0 %v193
  %v1021 = vpop.f32.mrb[0].mxu0
  %v1022 = vadd.f32 0.0, %v1021
  %v1023 = vpop.f32.mrb[0].mxu0
  %v1024 = vadd.f32 0.0, %v1023
  %v1025 = vpop.f32.mrb[0].mxu0
  %v1026 = vadd.f32 0.0, %v1025
  %v1027 = vpop.f32.mrb[0].mxu0
  %v1028 = vadd.f32 0.0, %v1027
  %1029 = vdwg.mxu0
  %1030 = vmatprep.subr.bf16.mxu0 %v592
  %1031 = vmatpush1.bf16.msra.mxu0 %v591
  %1032 = vmatprep.subr.bf16.mxu0 %v600
  %1033 = vmatpush1.bf16.msra.mxu0 %v599
  %1034 = vmatprep.subr.bf16.mxu0 %v608
  %1035 = vmatpush1.bf16.msra.mxu0 %v607
  %1036 = vmatprep.subr.bf16.mxu0 %v616
  %1037 = vmatpush1.bf16.msra.mxu0 %v615
  %1038 = vmatprep.subr.bf16.mxu0 %v624
  %1039 = vmatpush1.bf16.msra.mxu0 %v623
  %1040 = vmatprep.subr.bf16.mxu0 %v632
  %1041 = vmatpush1.bf16.msra.mxu0 %v631
  %1042 = vmatprep.subr.bf16.mxu0 %v640
  %1043 = vmatpush1.bf16.msra.mxu0 %v639
  %1044 = vmatprep.subr.bf16.mxu0 %v648
  %1045 = vmatpush1.bf16.msra.mxu0 %v647
  %1046 = vmatprep.subr.bf16.mxu0 %v656
  %1047 = vmatpush1.bf16.msra.mxu0 %v655
  %1048 = vmatprep.subr.bf16.mxu0 %v664
  %1049 = vmatpush1.bf16.msra.mxu0 %v663
  %1050 = vmatprep.subr.bf16.mxu0 %v672
  %1051 = vmatpush1.bf16.msra.mxu0 %v671
  %1052 = vmatprep.subr.bf16.mxu0 %v680
  %1053 = vmatpush1.bf16.msra.mxu0 %v679
  %1054 = vmatprep.subr.bf16.mxu0 %v688
  %1055 = vmatpush1.bf16.msra.mxu0 %v687
  %1056 = vmatprep.subr.bf16.mxu0 %v696
  %1057 = vmatpush1.bf16.msra.mxu0 %v695
  %1058 = vmatprep.subr.bf16.mxu0 %v704
  %1059 = vmatpush1.bf16.msra.mxu0 %v703
  %1060 = vmatprep.subr.bf16.mxu0 %v712
  %1061 = vmatpush1.bf16.msra.mxu0 %v711
  %1062 = vmatprep.mubr.bf16.mxu0 %v190
  %1063 = vmatmul.mubr.bf16.gmra.mrb[0].mxu0 %v189
  %v1064 = vpop.f32.mrb[0].mxu0
  %v1065 = vadd.f32 0.0, %v1064
  %v1066 = vpop.f32.mrb[0].mxu0
  %v1067 = vadd.f32 0.0, %v1066
  %v1068 = vpop.f32.mrb[0].mxu0
  %v1069 = vadd.f32 0.0, %v1068
  %v1070 = vpop.f32.mrb[0].mxu0
  %v1071 = vadd.f32 0.0, %v1070
  %1072 = vmatprep.mubr.bf16.mxu0 %v192
  %1073 = vmatmul.mubr.bf16.gmra.mrb[0].mxu0 %v191
  %v1074 = vpop.f32.mrb[0].mxu0
  %v1075 = vadd.f32 0.0, %v1074
  %v1076 = vpop.f32.mrb[0].mxu0
  %v1077 = vadd.f32 0.0, %v1076
  %v1078 = vpop.f32.mrb[0].mxu0
  %v1079 = vadd.f32 0.0, %v1078
  %v1080 = vpop.f32.mrb[0].mxu0
  %v1081 = vadd.f32 0.0, %v1080
  %1082 = vmatprep.mubr.bf16.mxu0 %v194
  %1083 = vmatmul.mubr.bf16.gmra.mrb[0].mxu0 %v193
  %v1084 = vpop.f32.mrb[0].mxu0
  %v1085 = vadd.f32 0.0, %v1084
  %v1086 = vpop.f32.mrb[0].mxu0
  %v1087 = vadd.f32 0.0, %v1086
  %v1088 = vpop.f32.mrb[0].mxu0
  %v1089 = vadd.f32 0.0, %v1088
  %v1090 = vpop.f32.mrb[0].mxu0
  %v1091 = vadd.f32 0.0, %v1090
  %1092 = vdwg.mxu0
  %v1093 = vld [vmem:[%s2] sm:$0xff]
  %v1095 = vlaneseq
  %v1096 = vshrl.u32 %v1095, 7
  %v1097 = vsub.s32 0, %v1096
  %v1098 = vrot.slane %v1093, %v1097
  %v1099 = vlaneseq
  %v1100 = vshrl.u32 %v1099, 7
  %v1101 = vsub.s32 1, %v1100
  %v1102 = vrot.slane %v1093, %v1101
  %v1103 = vlaneseq
  %v1104 = vshrl.u32 %v1103, 7
  %v1105 = vsub.s32 2, %v1104
  %v1106 = vrot.slane %v1093, %v1105
  %v1107 = vlaneseq
  %v1108 = vshrl.u32 %v1107, 7
  %v1109 = vsub.s32 3, %v1108
  %v1110 = vrot.slane %v1093, %v1109
  %v1111 = vlaneseq
  %v1112 = vshrl.u32 %v1111, 7
  %v1113 = vsub.s32 4, %v1112
  %v1114 = vrot.slane %v1093, %v1113
  %v1115 = vlaneseq
  %v1116 = vshrl.u32 %v1115, 7
  %v1117 = vsub.s32 5, %v1116
  %v1118 = vrot.slane %v1093, %v1117
  %v1119 = vlaneseq
  %v1120 = vshrl.u32 %v1119, 7
  %v1121 = vsub.s32 6, %v1120
  %v1122 = vrot.slane %v1093, %v1121
  %v1123 = vlaneseq
  %v1124 = vshrl.u32 %v1123, 7
  %v1125 = vsub.s32 7, %v1124
  %v1126 = vrot.slane %v1093, %v1125
  %v1135 = vmul.f32 %v876, %v1098
  %v1136 = vmul.f32 %v878, %v1102
  %v1137 = vmul.f32 %v939, %v1106
  %v1138 = vmul.f32 %v941, %v1110
  %v1139 = vmul.f32 %v1002, %v1114
  %v1140 = vmul.f32 %v1004, %v1118
  %v1141 = vmul.f32 %v1065, %v1122
  %v1142 = vmul.f32 %v1067, %v1126
  %v1143 = vmul.f32 %v880, %v1098
  %v1144 = vmul.f32 %v882, %v1102
  %v1145 = vmul.f32 %v943, %v1106
  %v1146 = vmul.f32 %v945, %v1110
  %v1147 = vmul.f32 %v1006, %v1114
  %v1148 = vmul.f32 %v1008, %v1118
  %v1149 = vmul.f32 %v1069, %v1122
  %v1150 = vmul.f32 %v1071, %v1126
  %v1151 = vmul.f32 %v886, %v1098
  %v1152 = vmul.f32 %v888, %v1102
  %v1153 = vmul.f32 %v949, %v1106
  %v1154 = vmul.f32 %v951, %v1110
  %v1155 = vmul.f32 %v1012, %v1114
  %v1156 = vmul.f32 %v1014, %v1118
  %v1157 = vmul.f32 %v1075, %v1122
  %v1158 = vmul.f32 %v1077, %v1126
  %v1159 = vmul.f32 %v890, %v1098
  %v1160 = vmul.f32 %v892, %v1102
  %v1161 = vmul.f32 %v953, %v1106
  %v1162 = vmul.f32 %v955, %v1110
  %v1163 = vmul.f32 %v1016, %v1114
  %v1164 = vmul.f32 %v1018, %v1118
  %v1165 = vmul.f32 %v1079, %v1122
  %v1166 = vmul.f32 %v1081, %v1126
  %v1167 = vmul.f32 %v896, %v1098
  %v1168 = vmul.f32 %v898, %v1102
  %v1169 = vmul.f32 %v959, %v1106
  %v1170 = vmul.f32 %v961, %v1110
  %v1171 = vmul.f32 %v1022, %v1114
  %v1172 = vmul.f32 %v1024, %v1118
  %v1173 = vmul.f32 %v1085, %v1122
  %v1174 = vmul.f32 %v1087, %v1126
  %v1175 = vmul.f32 %v900, %v1098
  %v1176 = vmul.f32 %v902, %v1102
  %v1177 = vmul.f32 %v963, %v1106
  %v1178 = vmul.f32 %v965, %v1110
  %v1179 = vmul.f32 %v1026, %v1114
  %v1180 = vmul.f32 %v1028, %v1118
  %v1181 = vmul.f32 %v1089, %v1122
  %v1182 = vmul.f32 %v1091, %v1126
  %v1183 = vmax.f32 %v1135, -1.0
  %v1184 = vmax.f32 %v1136, -1.0
  %v1185 = vmax.f32 %v1137, -1.0
  %v1186 = vmax.f32 %v1138, -1.0
  %v1187 = vmax.f32 %v1139, -1.0
  %v1188 = vmax.f32 %v1140, -1.0
  %v1189 = vmax.f32 %v1141, -1.0
  %v1190 = vmax.f32 %v1142, -1.0
  %v1191 = vmax.f32 %v1143, -1.0
  %v1192 = vmax.f32 %v1144, -1.0
  %v1193 = vmax.f32 %v1145, -1.0
  %v1194 = vmax.f32 %v1146, -1.0
  %v1195 = vmax.f32 %v1147, -1.0
  %v1196 = vmax.f32 %v1148, -1.0
  %v1197 = vmax.f32 %v1149, -1.0
  %v1198 = vmax.f32 %v1150, -1.0
  %v1199 = vmax.f32 %v1151, -1.0
  %v1200 = vmax.f32 %v1152, -1.0
  %v1201 = vmax.f32 %v1153, -1.0
  %v1202 = vmax.f32 %v1154, -1.0
  %v1203 = vmax.f32 %v1155, -1.0
  %v1204 = vmax.f32 %v1156, -1.0
  %v1205 = vmax.f32 %v1157, -1.0
  %v1206 = vmax.f32 %v1158, -1.0
  %v1207 = vmax.f32 %v1159, -1.0
  %v1208 = vmax.f32 %v1160, -1.0
  %v1209 = vmax.f32 %v1161, -1.0
  %v1210 = vmax.f32 %v1162, -1.0
  %v1211 = vmax.f32 %v1163, -1.0
  %v1212 = vmax.f32 %v1164, -1.0
  %v1213 = vmax.f32 %v1165, -1.0
  %v1214 = vmax.f32 %v1166, -1.0
  %v1215 = vmax.f32 %v1167, -1.0
  %v1216 = vmax.f32 %v1168, -1.0
  %v1217 = vmax.f32 %v1169, -1.0
  %v1218 = vmax.f32 %v1170, -1.0
  %v1219 = vmax.f32 %v1171, -1.0
  %v1220 = vmax.f32 %v1172, -1.0
  %v1221 = vmax.f32 %v1173, -1.0
  %v1222 = vmax.f32 %v1174, -1.0
  %v1223 = vmax.f32 %v1175, -1.0
  %v1224 = vmax.f32 %v1176, -1.0
  %v1225 = vmax.f32 %v1177, -1.0
  %v1226 = vmax.f32 %v1178, -1.0
  %v1227 = vmax.f32 %v1179, -1.0
  %v1228 = vmax.f32 %v1180, -1.0
  %v1229 = vmax.f32 %v1181, -1.0
  %v1230 = vmax.f32 %v1182, -1.0
  %v1231 = vmin.f32 %v1183, 1.0
  %v1232 = vmin.f32 %v1184, 1.0
  %v1233 = vmin.f32 %v1185, 1.0
  %v1234 = vmin.f32 %v1186, 1.0
  %v1235 = vmin.f32 %v1187, 1.0
  %v1236 = vmin.f32 %v1188, 1.0
  %v1237 = vmin.f32 %v1189, 1.0
  %v1238 = vmin.f32 %v1190, 1.0
  %v1239 = vmin.f32 %v1191, 1.0
  %v1240 = vmin.f32 %v1192, 1.0
  %v1241 = vmin.f32 %v1193, 1.0
  %v1242 = vmin.f32 %v1194, 1.0
  %v1243 = vmin.f32 %v1195, 1.0
  %v1244 = vmin.f32 %v1196, 1.0
  %v1245 = vmin.f32 %v1197, 1.0
  %v1246 = vmin.f32 %v1198, 1.0
  %v1247 = vmin.f32 %v1199, 1.0
  %v1248 = vmin.f32 %v1200, 1.0
  %v1249 = vmin.f32 %v1201, 1.0
  %v1250 = vmin.f32 %v1202, 1.0
  %v1251 = vmin.f32 %v1203, 1.0
  %v1252 = vmin.f32 %v1204, 1.0
  %v1253 = vmin.f32 %v1205, 1.0
  %v1254 = vmin.f32 %v1206, 1.0
  %v1255 = vmin.f32 %v1207, 1.0
  %v1256 = vmin.f32 %v1208, 1.0
  %v1257 = vmin.f32 %v1209, 1.0
  %v1258 = vmin.f32 %v1210, 1.0
  %v1259 = vmin.f32 %v1211, 1.0
  %v1260 = vmin.f32 %v1212, 1.0
  %v1261 = vmin.f32 %v1213, 1.0
  %v1262 = vmin.f32 %v1214, 1.0
  %v1263 = vmin.f32 %v1215, 1.0
  %v1264 = vmin.f32 %v1216, 1.0
  %v1265 = vmin.f32 %v1217, 1.0
  %v1266 = vmin.f32 %v1218, 1.0
  %v1267 = vmin.f32 %v1219, 1.0
  %v1268 = vmin.f32 %v1220, 1.0
  %v1269 = vmin.f32 %v1221, 1.0
  %v1270 = vmin.f32 %v1222, 1.0
  %v1271 = vmin.f32 %v1223, 1.0
  %v1272 = vmin.f32 %v1224, 1.0
  %v1273 = vmin.f32 %v1225, 1.0
  %v1274 = vmin.f32 %v1226, 1.0
  %v1275 = vmin.f32 %v1227, 1.0
  %v1276 = vmin.f32 %v1228, 1.0
  %v1277 = vmin.f32 %v1229, 1.0
  %v1278 = vmin.f32 %v1230, 1.0
  %v1279 = vld [vmem:[%s3] sm:$0xff]
  %v1280 = vld [vmem:[%s3 + $0x8] sm:$0xff]
  %v1281 = vld [vmem:[%s3 + $0x10] sm:$0xff]
  %v1282 = vld [vmem:[%s3 + $0x18] sm:$0xff]
  %v1283 = vld [vmem:[%s3 + $0x20] sm:$0xff]
  %v1284 = vld [vmem:[%s3 + $0x28] sm:$0xff]
  %1286 = vset.pattern.permute.xlu0 0
  %1287 = vperm.xlu0 %1286, %v1279
  %v1288 = vpop.permute.xlu0 %1287
  %1291 = vset.pattern.permute.xlu0 0
  %1292 = vperm.xlu0 %1291, %v1280
  %v1293 = vpop.permute.xlu0 %1292
  %1296 = vset.pattern.permute.xlu0 0
  %1297 = vperm.xlu0 %1296, %v1281
  %v1298 = vpop.permute.xlu0 %1297
  %1301 = vset.pattern.permute.xlu0 0
  %1302 = vperm.xlu0 %1301, %v1282
  %v1303 = vpop.permute.xlu0 %1302
  %1306 = vset.pattern.permute.xlu0 0
  %1307 = vperm.xlu0 %1306, %v1283
  %v1308 = vpop.permute.xlu0 %1307
  %1311 = vset.pattern.permute.xlu0 0
  %1312 = vperm.xlu0 %1311, %v1284
  %v1313 = vpop.permute.xlu0 %1312
  %vm1315 = vcmp.gt.f32.partialorder %v1231, %v1288
  %vm1316 = vcmp.gt.f32.partialorder %v1232, %v1288
  %vm1317 = vcmp.gt.f32.partialorder %v1233, %v1288
  %vm1318 = vcmp.gt.f32.partialorder %v1234, %v1288
  %vm1319 = vcmp.gt.f32.partialorder %v1235, %v1288
  %vm1320 = vcmp.gt.f32.partialorder %v1236, %v1288
  %vm1321 = vcmp.gt.f32.partialorder %v1237, %v1288
  %vm1322 = vcmp.gt.f32.partialorder %v1238, %v1288
  %vm1323 = vcmp.gt.f32.partialorder %v1239, %v1293
  %vm1324 = vcmp.gt.f32.partialorder %v1240, %v1293
  %vm1325 = vcmp.gt.f32.partialorder %v1241, %v1293
  %vm1326 = vcmp.gt.f32.partialorder %v1242, %v1293
  %vm1327 = vcmp.gt.f32.partialorder %v1243, %v1293
  %vm1328 = vcmp.gt.f32.partialorder %v1244, %v1293
  %vm1329 = vcmp.gt.f32.partialorder %v1245, %v1293
  %vm1330 = vcmp.gt.f32.partialorder %v1246, %v1293
  %vm1331 = vcmp.gt.f32.partialorder %v1247, %v1298
  %vm1332 = vcmp.gt.f32.partialorder %v1248, %v1298
  %vm1333 = vcmp.gt.f32.partialorder %v1249, %v1298
  %vm1334 = vcmp.gt.f32.partialorder %v1250, %v1298
  %vm1335 = vcmp.gt.f32.partialorder %v1251, %v1298
  %vm1336 = vcmp.gt.f32.partialorder %v1252, %v1298
  %vm1337 = vcmp.gt.f32.partialorder %v1253, %v1298
  %vm1338 = vcmp.gt.f32.partialorder %v1254, %v1298
  %vm1339 = vcmp.gt.f32.partialorder %v1255, %v1303
  %vm1340 = vcmp.gt.f32.partialorder %v1256, %v1303
  %vm1341 = vcmp.gt.f32.partialorder %v1257, %v1303
  %vm1342 = vcmp.gt.f32.partialorder %v1258, %v1303
  %vm1343 = vcmp.gt.f32.partialorder %v1259, %v1303
  %vm1344 = vcmp.gt.f32.partialorder %v1260, %v1303
  %vm1345 = vcmp.gt.f32.partialorder %v1261, %v1303
  %vm1346 = vcmp.gt.f32.partialorder %v1262, %v1303
  %vm1347 = vcmp.gt.f32.partialorder %v1263, %v1308
  %vm1348 = vcmp.gt.f32.partialorder %v1264, %v1308
  %vm1349 = vcmp.gt.f32.partialorder %v1265, %v1308
  %vm1350 = vcmp.gt.f32.partialorder %v1266, %v1308
  %vm1351 = vcmp.gt.f32.partialorder %v1267, %v1308
  %vm1352 = vcmp.gt.f32.partialorder %v1268, %v1308
  %vm1353 = vcmp.gt.f32.partialorder %v1269, %v1308
  %vm1354 = vcmp.gt.f32.partialorder %v1270, %v1308
  %vm1355 = vcmp.gt.f32.partialorder %v1271, %v1313
  %vm1356 = vcmp.gt.f32.partialorder %v1272, %v1313
  %vm1357 = vcmp.gt.f32.partialorder %v1273, %v1313
  %vm1358 = vcmp.gt.f32.partialorder %v1274, %v1313
  %vm1359 = vcmp.gt.f32.partialorder %v1275, %v1313
  %vm1360 = vcmp.gt.f32.partialorder %v1276, %v1313
  %vm1361 = vcmp.gt.f32.partialorder %v1277, %v1313
  %vm1362 = vcmp.gt.f32.partialorder %v1278, %v1313
  %v1363 = vld [vmem:[%s5] sm:$0xff]
  %v1364 = vld [vmem:[%s5 + $0x8] sm:$0xff]
  %v1365 = vld [vmem:[%s5 + $0x10] sm:$0xff]
  %v1366 = vld [vmem:[%s5 + $0x18] sm:$0xff]
  %v1367 = vld [vmem:[%s5 + $0x20] sm:$0xff]
  %v1368 = vld [vmem:[%s5 + $0x28] sm:$0xff]
  %v1369 = vsel %vm1315, %v1231, 0.0
  %v1370 = vsel %vm1316, %v1232, 0.0
  %v1371 = vsel %vm1317, %v1233, 0.0
  %v1372 = vsel %vm1318, %v1234, 0.0
  %v1373 = vsel %vm1319, %v1235, 0.0
  %v1374 = vsel %vm1320, %v1236, 0.0
  %v1375 = vsel %vm1321, %v1237, 0.0
  %v1376 = vsel %vm1322, %v1238, 0.0
  %v1377 = vsel %vm1323, %v1239, 0.0
  %v1378 = vsel %vm1324, %v1240, 0.0
  %v1379 = vsel %vm1325, %v1241, 0.0
  %v1380 = vsel %vm1326, %v1242, 0.0
  %v1381 = vsel %vm1327, %v1243, 0.0
  %v1382 = vsel %vm1328, %v1244, 0.0
  %v1383 = vsel %vm1329, %v1245, 0.0
  %v1384 = vsel %vm1330, %v1246, 0.0
  %v1385 = vsel %vm1331, %v1247, 0.0
  %v1386 = vsel %vm1332, %v1248, 0.0
  %v1387 = vsel %vm1333, %v1249, 0.0
  %v1388 = vsel %vm1334, %v1250, 0.0
  %v1389 = vsel %vm1335, %v1251, 0.0
  %v1390 = vsel %vm1336, %v1252, 0.0
  %v1391 = vsel %vm1337, %v1253, 0.0
  %v1392 = vsel %vm1338, %v1254, 0.0
  %v1393 = vsel %vm1339, %v1255, 0.0
  %v1394 = vsel %vm1340, %v1256, 0.0
  %v1395 = vsel %vm1341, %v1257, 0.0
  %v1396 = vsel %vm1342, %v1258, 0.0
  %v1397 = vsel %vm1343, %v1259, 0.0
  %v1398 = vsel %vm1344, %v1260, 0.0
  %v1399 = vsel %vm1345, %v1261, 0.0
  %v1400 = vsel %vm1346, %v1262, 0.0
  %v1401 = vsel %vm1347, %v1263, 0.0
  %v1402 = vsel %vm1348, %v1264, 0.0
  %v1403 = vsel %vm1349, %v1265, 0.0
  %v1404 = vsel %vm1350, %v1266, 0.0
  %v1405 = vsel %vm1351, %v1267, 0.0
  %v1406 = vsel %vm1352, %v1268, 0.0
  %v1407 = vsel %vm1353, %v1269, 0.0
  %v1408 = vsel %vm1354, %v1270, 0.0
  %v1409 = vsel %vm1355, %v1271, 0.0
  %v1410 = vsel %vm1356, %v1272, 0.0
  %v1411 = vsel %vm1357, %v1273, 0.0
  %v1412 = vsel %vm1358, %v1274, 0.0
  %v1413 = vsel %vm1359, %v1275, 0.0
  %v1414 = vsel %vm1360, %v1276, 0.0
  %v1415 = vsel %vm1361, %v1277, 0.0
  %v1416 = vsel %vm1362, %v1278, 0.0
  %v1417 = vadd.f32 %v1369, %v1370
  %v1418 = vadd.f32 %v1417, %v1371
  %v1419 = vadd.f32 %v1418, %v1372
  %v1420 = vadd.f32 %v1419, %v1373
  %v1421 = vadd.f32 %v1420, %v1374
  %v1422 = vadd.f32 %v1421, %v1375
  %v1423 = vadd.f32 %v1422, %v1376
  %1424 = vadd.xlane.f32.xlu0 %v1423
  %v1425 = vpop.xlane.xlu0 %1424
  %v1426 = vadd.f32 %v1377, %v1378
  %v1427 = vadd.f32 %v1426, %v1379
  %v1428 = vadd.f32 %v1427, %v1380
  %v1429 = vadd.f32 %v1428, %v1381
  %v1430 = vadd.f32 %v1429, %v1382
  %v1431 = vadd.f32 %v1430, %v1383
  %v1432 = vadd.f32 %v1431, %v1384
  %1433 = vadd.xlane.f32.xlu0 %v1432
  %v1434 = vpop.xlane.xlu0 %1433
  %v1435 = vadd.f32 %v1385, %v1386
  %v1436 = vadd.f32 %v1435, %v1387
  %v1437 = vadd.f32 %v1436, %v1388
  %v1438 = vadd.f32 %v1437, %v1389
  %v1439 = vadd.f32 %v1438, %v1390
  %v1440 = vadd.f32 %v1439, %v1391
  %v1441 = vadd.f32 %v1440, %v1392
  %1442 = vadd.xlane.f32.xlu0 %v1441
  %v1443 = vpop.xlane.xlu0 %1442
  %v1444 = vadd.f32 %v1393, %v1394
  %v1445 = vadd.f32 %v1444, %v1395
  %v1446 = vadd.f32 %v1445, %v1396
  %v1447 = vadd.f32 %v1446, %v1397
  %v1448 = vadd.f32 %v1447, %v1398
  %v1449 = vadd.f32 %v1448, %v1399
  %v1450 = vadd.f32 %v1449, %v1400
  %1451 = vadd.xlane.f32.xlu0 %v1450
  %v1452 = vpop.xlane.xlu0 %1451
  %v1453 = vadd.f32 %v1401, %v1402
  %v1454 = vadd.f32 %v1453, %v1403
  %v1455 = vadd.f32 %v1454, %v1404
  %v1456 = vadd.f32 %v1455, %v1405
  %v1457 = vadd.f32 %v1456, %v1406
  %v1458 = vadd.f32 %v1457, %v1407
  %v1459 = vadd.f32 %v1458, %v1408
  %1460 = vadd.xlane.f32.xlu0 %v1459
  %v1461 = vpop.xlane.xlu0 %1460
  %v1462 = vadd.f32 %v1409, %v1410
  %v1463 = vadd.f32 %v1462, %v1411
  %v1464 = vadd.f32 %v1463, %v1412
  %v1465 = vadd.f32 %v1464, %v1413
  %v1466 = vadd.f32 %v1465, %v1414
  %v1467 = vadd.f32 %v1466, %v1415
  %v1468 = vadd.f32 %v1467, %v1416
  %1469 = vadd.xlane.f32.xlu0 %v1468
  %v1470 = vpop.xlane.xlu0 %1469
  %v1471 = vadd.f32 %v1363, %v1425
  %v1472 = vadd.f32 %v1364, %v1434
  %v1473 = vadd.f32 %v1365, %v1443
  %v1474 = vadd.f32 %v1366, %v1452
  %v1475 = vadd.f32 %v1367, %v1461
  %v1476 = vadd.f32 %v1368, %v1470
  %vm1477 = vcmask 7168
  %1478 = vst.msk [vmem:[%s5] sm:$0xff] %vm1477, %v1471
  %1479 = vst.msk [vmem:[%s5 + $0x8] sm:$0xff] %vm1477, %v1472
  %1480 = vst.msk [vmem:[%s5 + $0x10] sm:$0xff] %vm1477, %v1473
  %1481 = vst.msk [vmem:[%s5 + $0x18] sm:$0xff] %vm1477, %v1474
  %1482 = vst.msk [vmem:[%s5 + $0x20] sm:$0xff] %vm1477, %v1475
  %1483 = vst.msk [vmem:[%s5 + $0x28] sm:$0xff] %vm1477, %v1476
  %v1484 = vld [vmem:[%s6] sm:$0xff]
  %v1485 = vld [vmem:[%s6 + $0x8] sm:$0xff]
  %v1486 = vld [vmem:[%s6 + $0x10] sm:$0xff]
  %v1487 = vld [vmem:[%s6 + $0x18] sm:$0xff]
  %v1488 = vld [vmem:[%s6 + $0x20] sm:$0xff]
  %v1489 = vld [vmem:[%s6 + $0x28] sm:$0xff]
  %v1490 = vsel %vm1315, 1.0, 0.0
  %v1491 = vsel %vm1316, 1.0, 0.0
  %v1492 = vsel %vm1317, 1.0, 0.0
  %v1493 = vsel %vm1318, 1.0, 0.0
  %v1494 = vsel %vm1319, 1.0, 0.0
  %v1495 = vsel %vm1320, 1.0, 0.0
  %v1496 = vsel %vm1321, 1.0, 0.0
  %v1497 = vsel %vm1322, 1.0, 0.0
  %v1498 = vsel %vm1323, 1.0, 0.0
  %v1499 = vsel %vm1324, 1.0, 0.0
  %v1500 = vsel %vm1325, 1.0, 0.0
  %v1501 = vsel %vm1326, 1.0, 0.0
  %v1502 = vsel %vm1327, 1.0, 0.0
  %v1503 = vsel %vm1328, 1.0, 0.0
  %v1504 = vsel %vm1329, 1.0, 0.0
  %v1505 = vsel %vm1330, 1.0, 0.0
  %v1506 = vsel %vm1331, 1.0, 0.0
  %v1507 = vsel %vm1332, 1.0, 0.0
  %v1508 = vsel %vm1333, 1.0, 0.0
  %v1509 = vsel %vm1334, 1.0, 0.0
  %v1510 = vsel %vm1335, 1.0, 0.0
  %v1511 = vsel %vm1336, 1.0, 0.0
  %v1512 = vsel %vm1337, 1.0, 0.0
  %v1513 = vsel %vm1338, 1.0, 0.0
  %v1514 = vsel %vm1339, 1.0, 0.0
  %v1515 = vsel %vm1340, 1.0, 0.0
  %v1516 = vsel %vm1341, 1.0, 0.0
  %v1517 = vsel %vm1342, 1.0, 0.0
  %v1518 = vsel %vm1343, 1.0, 0.0
  %v1519 = vsel %vm1344, 1.0, 0.0
  %v1520 = vsel %vm1345, 1.0, 0.0
  %v1521 = vsel %vm1346, 1.0, 0.0
  %v1522 = vsel %vm1347, 1.0, 0.0
  %v1523 = vsel %vm1348, 1.0, 0.0
  %v1524 = vsel %vm1349, 1.0, 0.0
  %v1525 = vsel %vm1350, 1.0, 0.0
  %v1526 = vsel %vm1351, 1.0, 0.0
  %v1527 = vsel %vm1352, 1.0, 0.0
  %v1528 = vsel %vm1353, 1.0, 0.0
  %v1529 = vsel %vm1354, 1.0, 0.0
  %v1530 = vsel %vm1355, 1.0, 0.0
  %v1531 = vsel %vm1356, 1.0, 0.0
  %v1532 = vsel %vm1357, 1.0, 0.0
  %v1533 = vsel %vm1358, 1.0, 0.0
  %v1534 = vsel %vm1359, 1.0, 0.0
  %v1535 = vsel %vm1360, 1.0, 0.0
  %v1536 = vsel %vm1361, 1.0, 0.0
  %v1537 = vsel %vm1362, 1.0, 0.0
  %v1538 = vadd.f32 %v1490, %v1491
  %v1539 = vadd.f32 %v1538, %v1492
  %v1540 = vadd.f32 %v1539, %v1493
  %v1541 = vadd.f32 %v1540, %v1494
  %v1542 = vadd.f32 %v1541, %v1495
  %v1543 = vadd.f32 %v1542, %v1496
  %v1544 = vadd.f32 %v1543, %v1497
  %1545 = vadd.xlane.f32.xlu0 %v1544
  %v1546 = vpop.xlane.xlu0 %1545
  %v1547 = vadd.f32 %v1498, %v1499
  %v1548 = vadd.f32 %v1547, %v1500
  %v1549 = vadd.f32 %v1548, %v1501
  %v1550 = vadd.f32 %v1549, %v1502
  %v1551 = vadd.f32 %v1550, %v1503
  %v1552 = vadd.f32 %v1551, %v1504
  %v1553 = vadd.f32 %v1552, %v1505
  %1554 = vadd.xlane.f32.xlu0 %v1553
  %v1555 = vpop.xlane.xlu0 %1554
  %v1556 = vadd.f32 %v1506, %v1507
  %v1557 = vadd.f32 %v1556, %v1508
  %v1558 = vadd.f32 %v1557, %v1509
  %v1559 = vadd.f32 %v1558, %v1510
  %v1560 = vadd.f32 %v1559, %v1511
  %v1561 = vadd.f32 %v1560, %v1512
  %v1562 = vadd.f32 %v1561, %v1513
  %1563 = vadd.xlane.f32.xlu0 %v1562
  %v1564 = vpop.xlane.xlu0 %1563
  %v1565 = vadd.f32 %v1514, %v1515
  %v1566 = vadd.f32 %v1565, %v1516
  %v1567 = vadd.f32 %v1566, %v1517
  %v1568 = vadd.f32 %v1567, %v1518
  %v1569 = vadd.f32 %v1568, %v1519
  %v1570 = vadd.f32 %v1569, %v1520
  %v1571 = vadd.f32 %v1570, %v1521
  %1572 = vadd.xlane.f32.xlu0 %v1571
  %v1573 = vpop.xlane.xlu0 %1572
  %v1574 = vadd.f32 %v1522, %v1523
  %v1575 = vadd.f32 %v1574, %v1524
  %v1576 = vadd.f32 %v1575, %v1525
  %v1577 = vadd.f32 %v1576, %v1526
  %v1578 = vadd.f32 %v1577, %v1527
  %v1579 = vadd.f32 %v1578, %v1528
  %v1580 = vadd.f32 %v1579, %v1529
  %1581 = vadd.xlane.f32.xlu0 %v1580
  %v1582 = vpop.xlane.xlu0 %1581
  %v1583 = vadd.f32 %v1530, %v1531
  %v1584 = vadd.f32 %v1583, %v1532
  %v1585 = vadd.f32 %v1584, %v1533
  %v1586 = vadd.f32 %v1585, %v1534
  %v1587 = vadd.f32 %v1586, %v1535
  %v1588 = vadd.f32 %v1587, %v1536
  %v1589 = vadd.f32 %v1588, %v1537
  %1590 = vadd.xlane.f32.xlu0 %v1589
  %v1591 = vpop.xlane.xlu0 %1590
  %v1592 = vadd.f32 %v1484, %v1546
  %v1593 = vadd.f32 %v1485, %v1555
  %v1594 = vadd.f32 %v1486, %v1564
  %v1595 = vadd.f32 %v1487, %v1573
  %v1596 = vadd.f32 %v1488, %v1582
  %v1597 = vadd.f32 %v1489, %v1591
  %1598 = vst.msk [vmem:[%s6] sm:$0xff] %vm1477, %v1592
  %1599 = vst.msk [vmem:[%s6 + $0x8] sm:$0xff] %vm1477, %v1593
  %1600 = vst.msk [vmem:[%s6 + $0x10] sm:$0xff] %vm1477, %v1594
  %1601 = vst.msk [vmem:[%s6 + $0x18] sm:$0xff] %vm1477, %v1595
  %1602 = vst.msk [vmem:[%s6 + $0x20] sm:$0xff] %vm1477, %v1596
  %1603 = vst.msk [vmem:[%s6 + $0x28] sm:$0xff] %vm1477, %v1597
  %v1604 = vmul.f32 %v1231, 70.4
  %v1605 = vmul.f32 %v1232, 70.4
  %v1606 = vmul.f32 %v1233, 70.4
  %v1607 = vmul.f32 %v1234, 70.4
  %v1608 = vmul.f32 %v1235, 70.4
  %v1609 = vmul.f32 %v1236, 70.4
  %v1610 = vmul.f32 %v1237, 70.4
  %v1611 = vmul.f32 %v1238, 70.4
  %v1612 = vmul.f32 %v1239, 70.4
  %v1613 = vmul.f32 %v1240, 70.4
  %v1614 = vmul.f32 %v1241, 70.4
  %v1615 = vmul.f32 %v1242, 70.4
  %v1616 = vmul.f32 %v1243, 70.4
  %v1617 = vmul.f32 %v1244, 70.4
  %v1618 = vmul.f32 %v1245, 70.4
  %v1619 = vmul.f32 %v1246, 70.4
  %v1620 = vmul.f32 %v1247, 70.4
  %v1621 = vmul.f32 %v1248, 70.4
  %v1622 = vmul.f32 %v1249, 70.4
  %v1623 = vmul.f32 %v1250, 70.4
  %v1624 = vmul.f32 %v1251, 70.4
  %v1625 = vmul.f32 %v1252, 70.4
  %v1626 = vmul.f32 %v1253, 70.4
  %v1627 = vmul.f32 %v1254, 70.4
  %v1628 = vmul.f32 %v1255, 70.4
  %v1629 = vmul.f32 %v1256, 70.4
  %v1630 = vmul.f32 %v1257, 70.4
  %v1631 = vmul.f32 %v1258, 70.4
  %v1632 = vmul.f32 %v1259, 70.4
  %v1633 = vmul.f32 %v1260, 70.4
  %v1634 = vmul.f32 %v1261, 70.4
  %v1635 = vmul.f32 %v1262, 70.4
  %v1636 = vmul.f32 %v1263, 70.4
  %v1637 = vmul.f32 %v1264, 70.4
  %v1638 = vmul.f32 %v1265, 70.4
  %v1639 = vmul.f32 %v1266, 70.4
  %v1640 = vmul.f32 %v1267, 70.4
  %v1641 = vmul.f32 %v1268, 70.4
  %v1642 = vmul.f32 %v1269, 70.4
  %v1643 = vmul.f32 %v1270, 70.4
  %v1644 = vmul.f32 %v1271, 70.4
  %v1645 = vmul.f32 %v1272, 70.4
  %v1646 = vmul.f32 %v1273, 70.4
  %v1647 = vmul.f32 %v1274, 70.4
  %v1648 = vmul.f32 %v1275, 70.4
  %v1649 = vmul.f32 %v1276, 70.4
  %v1650 = vmul.f32 %v1277, 70.4
  %v1651 = vmul.f32 %v1278, 70.4
  %v1652 = vadd.f32 %v1604, 12.8
  %v1653 = vadd.f32 %v1605, 12.8
  %v1654 = vadd.f32 %v1606, 12.8
  %v1655 = vadd.f32 %v1607, 12.8
  %v1656 = vadd.f32 %v1608, 12.8
  %v1657 = vadd.f32 %v1609, 12.8
  %v1658 = vadd.f32 %v1610, 12.8
  %v1659 = vadd.f32 %v1611, 12.8
  %v1660 = vadd.f32 %v1612, 12.8
  %v1661 = vadd.f32 %v1613, 12.8
  %v1662 = vadd.f32 %v1614, 12.8
  %v1663 = vadd.f32 %v1615, 12.8
  %v1664 = vadd.f32 %v1616, 12.8
  %v1665 = vadd.f32 %v1617, 12.8
  %v1666 = vadd.f32 %v1618, 12.8
  %v1667 = vadd.f32 %v1619, 12.8
  %v1668 = vadd.f32 %v1620, 12.8
  %v1669 = vadd.f32 %v1621, 12.8
  %v1670 = vadd.f32 %v1622, 12.8
  %v1671 = vadd.f32 %v1623, 12.8
  %v1672 = vadd.f32 %v1624, 12.8
  %v1673 = vadd.f32 %v1625, 12.8
  %v1674 = vadd.f32 %v1626, 12.8
  %v1675 = vadd.f32 %v1627, 12.8
  %v1676 = vadd.f32 %v1628, 12.8
  %v1677 = vadd.f32 %v1629, 12.8
  %v1678 = vadd.f32 %v1630, 12.8
  %v1679 = vadd.f32 %v1631, 12.8
  %v1680 = vadd.f32 %v1632, 12.8
  %v1681 = vadd.f32 %v1633, 12.8
  %v1682 = vadd.f32 %v1634, 12.8
  %v1683 = vadd.f32 %v1635, 12.8
  %v1684 = vadd.f32 %v1636, 12.8
  %v1685 = vadd.f32 %v1637, 12.8
  %v1686 = vadd.f32 %v1638, 12.8
  %v1687 = vadd.f32 %v1639, 12.8
  %v1688 = vadd.f32 %v1640, 12.8
  %v1689 = vadd.f32 %v1641, 12.8
  %v1690 = vadd.f32 %v1642, 12.8
  %v1691 = vadd.f32 %v1643, 12.8
  %v1692 = vadd.f32 %v1644, 12.8
  %v1693 = vadd.f32 %v1645, 12.8
  %v1694 = vadd.f32 %v1646, 12.8
  %v1695 = vadd.f32 %v1647, 12.8
  %v1696 = vadd.f32 %v1648, 12.8
  %v1697 = vadd.f32 %v1649, 12.8
  %v1698 = vadd.f32 %v1650, 12.8
  %v1699 = vadd.f32 %v1651, 12.8
  %v1700 = vmul.f32 %v1231, 64.0
  %v1701 = vmul.f32 %v1232, 64.0
  %v1702 = vmul.f32 %v1233, 64.0
  %v1703 = vmul.f32 %v1234, 64.0
  %v1704 = vmul.f32 %v1235, 64.0
  %v1705 = vmul.f32 %v1236, 64.0
  %v1706 = vmul.f32 %v1237, 64.0
  %v1707 = vmul.f32 %v1238, 64.0
  %v1708 = vmul.f32 %v1239, 64.0
  %v1709 = vmul.f32 %v1240, 64.0
  %v1710 = vmul.f32 %v1241, 64.0
  %v1711 = vmul.f32 %v1242, 64.0
  %v1712 = vmul.f32 %v1243, 64.0
  %v1713 = vmul.f32 %v1244, 64.0
  %v1714 = vmul.f32 %v1245, 64.0
  %v1715 = vmul.f32 %v1246, 64.0
  %v1716 = vmul.f32 %v1247, 64.0
  %v1717 = vmul.f32 %v1248, 64.0
  %v1718 = vmul.f32 %v1249, 64.0
  %v1719 = vmul.f32 %v1250, 64.0
  %v1720 = vmul.f32 %v1251, 64.0
  %v1721 = vmul.f32 %v1252, 64.0
  %v1722 = vmul.f32 %v1253, 64.0
  %v1723 = vmul.f32 %v1254, 64.0
  %v1724 = vmul.f32 %v1255, 64.0
  %v1725 = vmul.f32 %v1256, 64.0
  %v1726 = vmul.f32 %v1257, 64.0
  %v1727 = vmul.f32 %v1258, 64.0
  %v1728 = vmul.f32 %v1259, 64.0
  %v1729 = vmul.f32 %v1260, 64.0
  %v1730 = vmul.f32 %v1261, 64.0
  %v1731 = vmul.f32 %v1262, 64.0
  %v1732 = vmul.f32 %v1263, 64.0
  %v1733 = vmul.f32 %v1264, 64.0
  %v1734 = vmul.f32 %v1265, 64.0
  %v1735 = vmul.f32 %v1266, 64.0
  %v1736 = vmul.f32 %v1267, 64.0
  %v1737 = vmul.f32 %v1268, 64.0
  %v1738 = vmul.f32 %v1269, 64.0
  %v1739 = vmul.f32 %v1270, 64.0
  %v1740 = vmul.f32 %v1271, 64.0
  %v1741 = vmul.f32 %v1272, 64.0
  %v1742 = vmul.f32 %v1273, 64.0
  %v1743 = vmul.f32 %v1274, 64.0
  %v1744 = vmul.f32 %v1275, 64.0
  %v1745 = vmul.f32 %v1276, 64.0
  %v1746 = vmul.f32 %v1277, 64.0
  %v1747 = vmul.f32 %v1278, 64.0
  %v1748 = vsel %vm1315, %v1652, %v1700
  %v1749 = vsel %vm1316, %v1653, %v1701
  %v1750 = vsel %vm1317, %v1654, %v1702
  %v1751 = vsel %vm1318, %v1655, %v1703
  %v1752 = vsel %vm1319, %v1656, %v1704
  %v1753 = vsel %vm1320, %v1657, %v1705
  %v1754 = vsel %vm1321, %v1658, %v1706
  %v1755 = vsel %vm1322, %v1659, %v1707
  %v1756 = vsel %vm1323, %v1660, %v1708
  %v1757 = vsel %vm1324, %v1661, %v1709
  %v1758 = vsel %vm1325, %v1662, %v1710
  %v1759 = vsel %vm1326, %v1663, %v1711
  %v1760 = vsel %vm1327, %v1664, %v1712
  %v1761 = vsel %vm1328, %v1665, %v1713
  %v1762 = vsel %vm1329, %v1666, %v1714
  %v1763 = vsel %vm1330, %v1667, %v1715
  %v1764 = vsel %vm1331, %v1668, %v1716
  %v1765 = vsel %vm1332, %v1669, %v1717
  %v1766 = vsel %vm1333, %v1670, %v1718
  %v1767 = vsel %vm1334, %v1671, %v1719
  %v1768 = vsel %vm1335, %v1672, %v1720
  %v1769 = vsel %vm1336, %v1673, %v1721
  %v1770 = vsel %vm1337, %v1674, %v1722
  %v1771 = vsel %vm1338, %v1675, %v1723
  %v1772 = vsel %vm1339, %v1676, %v1724
  %v1773 = vsel %vm1340, %v1677, %v1725
  %v1774 = vsel %vm1341, %v1678, %v1726
  %v1775 = vsel %vm1342, %v1679, %v1727
  %v1776 = vsel %vm1343, %v1680, %v1728
  %v1777 = vsel %vm1344, %v1681, %v1729
  %v1778 = vsel %vm1345, %v1682, %v1730
  %v1779 = vsel %vm1346, %v1683, %v1731
  %v1780 = vsel %vm1347, %v1684, %v1732
  %v1781 = vsel %vm1348, %v1685, %v1733
  %v1782 = vsel %vm1349, %v1686, %v1734
  %v1783 = vsel %vm1350, %v1687, %v1735
  %v1784 = vsel %vm1351, %v1688, %v1736
  %v1785 = vsel %vm1352, %v1689, %v1737
  %v1786 = vsel %vm1353, %v1690, %v1738
  %v1787 = vsel %vm1354, %v1691, %v1739
  %v1788 = vsel %vm1355, %v1692, %v1740
  %v1789 = vsel %vm1356, %v1693, %v1741
  %v1790 = vsel %vm1357, %v1694, %v1742
  %v1791 = vsel %vm1358, %v1695, %v1743
  %v1792 = vsel %vm1359, %v1696, %v1744
  %v1793 = vsel %vm1360, %v1697, %v1745
  %v1794 = vsel %vm1361, %v1698, %v1746
  %v1795 = vsel %vm1362, %v1699, %v1747
  %1796 = vst [vmem:[%s4] sm:$0xff] %v1748
  %1797 = vst [vmem:[%s4 + $0x8] sm:$0xff] %v1749
  %1798 = vst [vmem:[%s4 + $0x10] sm:$0xff] %v1750
  %1799 = vst [vmem:[%s4 + $0x18] sm:$0xff] %v1751
  %1800 = vst [vmem:[%s4 + $0x20] sm:$0xff] %v1752
  %1801 = vst [vmem:[%s4 + $0x28] sm:$0xff] %v1753
  %1802 = vst [vmem:[%s4 + $0x30] sm:$0xff] %v1754
  %1803 = vst [vmem:[%s4 + $0x38] sm:$0xff] %v1755
  %1804 = vst [vmem:[%s4 + $0x40] sm:$0xff] %v1756
  %1805 = vst [vmem:[%s4 + $0x48] sm:$0xff] %v1757
  %1806 = vst [vmem:[%s4 + $0x50] sm:$0xff] %v1758
  %1807 = vst [vmem:[%s4 + $0x58] sm:$0xff] %v1759
  %1808 = vst [vmem:[%s4 + $0x60] sm:$0xff] %v1760
  %1809 = vst [vmem:[%s4 + $0x68] sm:$0xff] %v1761
  %1810 = vst [vmem:[%s4 + $0x70] sm:$0xff] %v1762
  %1811 = vst [vmem:[%s4 + $0x78] sm:$0xff] %v1763
  %1812 = vst [vmem:[%s4 + $0x80] sm:$0xff] %v1764
  %1813 = vst [vmem:[%s4 + $0x88] sm:$0xff] %v1765
  %1814 = vst [vmem:[%s4 + $0x90] sm:$0xff] %v1766
  %1815 = vst [vmem:[%s4 + $0x98] sm:$0xff] %v1767
  %1816 = vst [vmem:[%s4 + $0xa0] sm:$0xff] %v1768
  %1817 = vst [vmem:[%s4 + $0xa8] sm:$0xff] %v1769
  %1818 = vst [vmem:[%s4 + $0xb0] sm:$0xff] %v1770
  %1819 = vst [vmem:[%s4 + $0xb8] sm:$0xff] %v1771
  %1820 = vst [vmem:[%s4 + $0xc0] sm:$0xff] %v1772
  %1821 = vst [vmem:[%s4 + $0xc8] sm:$0xff] %v1773
  %1822 = vst [vmem:[%s4 + $0xd0] sm:$0xff] %v1774
  %1823 = vst [vmem:[%s4 + $0xd8] sm:$0xff] %v1775
  %1824 = vst [vmem:[%s4 + $0xe0] sm:$0xff] %v1776
  %1825 = vst [vmem:[%s4 + $0xe8] sm:$0xff] %v1777
  %1826 = vst [vmem:[%s4 + $0xf0] sm:$0xff] %v1778
  %1827 = vst [vmem:[%s4 + $0xf8] sm:$0xff] %v1779
  %1828 = vst [vmem:[%s4 + $0x100] sm:$0xff] %v1780
  %1829 = vst [vmem:[%s4 + $0x108] sm:$0xff] %v1781
  %1830 = vst [vmem:[%s4 + $0x110] sm:$0xff] %v1782
  %1831 = vst [vmem:[%s4 + $0x118] sm:$0xff] %v1783
  %1832 = vst [vmem:[%s4 + $0x120] sm:$0xff] %v1784
  %1833 = vst [vmem:[%s4 + $0x128] sm:$0xff] %v1785
  %1834 = vst [vmem:[%s4 + $0x130] sm:$0xff] %v1786
  %1835 = vst [vmem:[%s4 + $0x138] sm:$0xff] %v1787
  %1836 = vst [vmem:[%s4 + $0x140] sm:$0xff] %v1788
  %1837 = vst [vmem:[%s4 + $0x148] sm:$0xff] %v1789
  %1838 = vst [vmem:[%s4 + $0x150] sm:$0xff] %v1790
  %1839 = vst [vmem:[%s4 + $0x158] sm:$0xff] %v1791
  %1840 = vst [vmem:[%s4 + $0x160] sm:$0xff] %v1792
  %1841 = vst [vmem:[%s4 + $0x168] sm:$0xff] %v1793
  %1842 = vst [vmem:[%s4 + $0x170] sm:$0xff] %v1794
  %1843 = vst [vmem:[%s4 + $0x178] sm:$0xff] %v1795
  // Predicated region
  $region22: #{npcface_forward.3} parent=0 // pred_check
    _
  $region23: #{npcface_forward.3} parent=0 // pred_check_branch
    %1845 = sbr.rel (0) target = $region25
  $region24: #{npcface_forward.3} parent=0 // pred_region
    _
  $region25: #{npcface_forward.3} parent=0 // pred_fallthru
    _
  // Predicated region
  $region26: #{npcface_forward.3} parent=0 // pred_check
    _
  $region27: #{npcface_forward.3} parent=0 // pred_check_branch
    %1847 = sbr.rel (0) target = $region29
  $region28: #{npcface_forward.3} parent=0 // pred_region
    _
  $region29: #{npcface_forward.3} parent=0 // pred_fallthru
    _
  // Predicated region
  $region30: #{npcface_forward.3} parent=0 // pred_check
    _
  $region31: #{npcface_forward.3} parent=0 // pred_check_branch
    %1849 = sbr.rel (0) target = $region33
  $region32: #{npcface_forward.3} parent=0 // pred_region
    _
  $region33: #{npcface_forward.3} parent=0 // pred_fallthru
    _
  // Predicated region
  $region34: #{npcface_forward.3} parent=0 // pred_check
    _
  $region35: #{npcface_forward.3} parent=0 // pred_check_branch
    %1851 = sbr.rel (0) target = $region37
  $region36: #{npcface_forward.3} parent=0 // pred_region
    _
  $region37: #{npcface_forward.3} parent=0 // pred_fallthru
    _
  // Predicated region
  $region38: #{npcface_forward.3} parent=0 // pred_check
    _
  $region39: #{npcface_forward.3} parent=0 // pred_check_branch
    %1853 = sbr.rel (0) target = $region41
  $region40: #{npcface_forward.3} parent=0 // pred_region
    _
  $region41: #{npcface_forward.3} parent=0 // pred_fallthru
    _
  // Predicated region
  $region42: #{npcface_forward.3} parent=0 // pred_check
    _
  $region43: #{npcface_forward.3} parent=0 // pred_check_branch
    %1855 = sbr.rel (0) target = $region45
  $region44: #{npcface_forward.3} parent=0 // pred_region
    _
  $region45: #{npcface_forward.3} parent=0 // pred_fallthru
    _

</llo_original>
